<compile_context>
chip_gen: v7x
topology: tpu7x:2x2x1
jax: 0.10.0
libtpu: 0.0.40
codegen_flags: <defaults>
</compile_context>

<pallas_src>
import jax
import jax.numpy as jnp
from jax.experimental import pallas as pl
from jax.experimental.pallas import tpu as pltpu

# ----------------------------- model dimensions -----------------------------
B, S, H = 2, 8, 32            # batch, seq len, hidden size
NUM_HEADS = 4
HEAD_DIM = H // NUM_HEADS
FFN = 64                      # intermediate size
NUM_LAYERS = 2
VOCAB = 128
TYPE_VOCAB = 2
MAX_POS = 64
LN_EPS = 1e-12
OUT_LANES = 128               # lane-dense output slab width
NEG_INF = -1e9

# ----------------------------- packed-slab layout ---------------------------
SLAB_LANES = 128
# bf16 matmul-weight slab, per layer: [Wqkv (H rows) | Wo (H) | W1 (H) | W2 (FFN)]
WQKV_OFF, WO_OFF, W1_OFF, W2_OFF = 0, H, 2 * H, 3 * H
LAYER_W_ROWS = 3 * H + FFN                      # 160 rows / layer (mult of 16 for bf16)
W_SLAB_ROWS = NUM_LAYERS * LAYER_W_ROWS         # 320
# f32 bias / LayerNorm / regressor slab: one row per parameter, lane-padded to 128
R_EMB_G, R_EMB_B = 0, 1
P_LAYER_BASE, P_LAYER_ROWS = 2, 8
R_BQKV, R_BO, R_G1, R_BE1, R_B1, R_B2, R_G2, R_BE2 = range(8)
R_REG_W = P_LAYER_BASE + NUM_LAYERS * P_LAYER_ROWS
R_REG_B = R_REG_W + 1
P_SLAB_ROWS = ((R_REG_B + 1 + 7) // 8) * 8      # 24


# ----------------------------- kernel helpers -------------------------------

def _layer_norm(x, g, b):
    mu = jnp.mean(x, axis=-1, keepdims=True)
    var = jnp.mean((x - mu) ** 2, axis=-1, keepdims=True)
    return (x - mu) * jax.lax.rsqrt(var + LN_EPS) * g + b


def _erf(x):
    # Exact-to-f32-precision erf via Abramowitz & Stegun 7.1.26 (|err| < 1.5e-7).
    # Uses only exp / VPU ops, guaranteed to lower in Mosaic.
    a1, a2, a3, a4, a5 = 0.254829592, -0.284496736, 1.421413741, -1.453152027, 1.061405429
    p = 0.3275911
    sign = jnp.where(x >= 0.0, 1.0, -1.0)
    ax = jnp.abs(x)
    t = 1.0 / (1.0 + p * ax)
    poly = ((((a5 * t + a4) * t + a3) * t + a2) * t + a1) * t
    return sign * (1.0 - poly * jnp.exp(-ax * ax))


def _gelu(x):
    # Exact erf-GELU (HF BERT default), via the polynomial erf above.
    return 0.5 * x * (1.0 + _erf(x * 0.7071067811865476))


# ------------------------------- fused kernel -------------------------------

def fused_bert_kernel(x_ref, mask_ref, w_ref, p_ref, o_ref):
    # One grid step == one batch element ("parallel" -> sharded across v7x TCs).
    x = x_ref[0]                                   # (S, H) raw embedding sum, f32
    m = mask_ref[0]                                # (NH*S, NH*S) additive mask
    x = _layer_norm(x,
                    p_ref[R_EMB_G:R_EMB_G + 1, 0:H],
                    p_ref[R_EMB_B:R_EMB_B + 1, 0:H])
    scale = 1.0 / (HEAD_DIM ** 0.5)

    for l in range(NUM_LAYERS):                    # static unroll over layers
        wl = l * LAYER_W_ROWS
        pb = P_LAYER_BASE + l * P_LAYER_ROWS
        # static slices into the two packed slabs
        wqkv = w_ref[wl + WQKV_OFF: wl + WQKV_OFF + H, 0:3 * H]   # (H, 3H) bf16
        wo = w_ref[wl + WO_OFF:   wl + WO_OFF + H, 0:H]           # (H, H)  bf16
        w1 = w_ref[wl + W1_OFF:   wl + W1_OFF + H, 0:FFN]         # (H, FFN) bf16
        w2 = w_ref[wl + W2_OFF:   wl + W2_OFF + FFN, 0:H]         # (FFN, H) bf16
        bqkv = p_ref[pb + R_BQKV: pb + R_BQKV + 1, 0:3 * H]
        bo = p_ref[pb + R_BO:  pb + R_BO + 1, 0:H]
        g1 = p_ref[pb + R_G1:  pb + R_G1 + 1, 0:H]
        be1 = p_ref[pb + R_BE1: pb + R_BE1 + 1, 0:H]
        b1 = p_ref[pb + R_B1:  pb + R_B1 + 1, 0:FFN]
        b2 = p_ref[pb + R_B2:  pb + R_B2 + 1, 0:H]
        g2 = p_ref[pb + R_G2:  pb + R_G2 + 1, 0:H]
        be2 = p_ref[pb + R_BE2: pb + R_BE2 + 1, 0:H]

        # fused QKV projection: one 96-wide matmul (bf16 in, f32 accumulate)
        qkv = jnp.dot(x.astype(jnp.bfloat16), wqkv,
                      preferred_element_type=jnp.float32) + bqkv          # (S, 3H)

        # Stack all heads along sublanes -> (NH*S, HEAD_DIM); everything in vregs.
        q_all = jnp.concatenate(
            [qkv[:, h * HEAD_DIM:(h + 1) * HEAD_DIM] for h in range(NUM_HEADS)], axis=0)
        k_all = jnp.concatenate(
            [qkv[:, H + h * HEAD_DIM:H + (h + 1) * HEAD_DIM] for h in range(NUM_HEADS)], axis=0)
        v_all = jnp.concatenate(
            [qkv[:, 2 * H + h * HEAD_DIM:2 * H + (h + 1) * HEAD_DIM] for h in range(NUM_HEADS)], axis=0)

        # ONE block-diagonal score matmul, ONE softmax chain, ONE P@V matmul.
        s = jax.lax.dot_general(q_all, k_all, (((1,), (1,)), ((), ())),
                                preferred_element_type=jnp.float32) * scale + m
        s = s - jnp.max(s, axis=-1, keepdims=True)
        p = jnp.exp(s)
        p = p * pl.reciprocal(jnp.sum(p, axis=-1, keepdims=True), approx=True)
        ctx = jnp.dot(p, v_all, preferred_element_type=jnp.float32)       # (NH*S, HD)

        # Reassemble heads along lanes in-register: (NH*S, HD) -> (S, H).
        attn = jnp.concatenate(
            [ctx[h * S:(h + 1) * S, :] for h in range(NUM_HEADS)], axis=1)

        attn = jnp.dot(attn.astype(jnp.bfloat16), wo,
                       preferred_element_type=jnp.float32) + bo
        h1 = _layer_norm(x + attn, g1, be1)

        ff = _gelu(jnp.dot(h1.astype(jnp.bfloat16), w1,
                           preferred_element_type=jnp.float32) + b1)
        ff = jnp.dot(ff.astype(jnp.bfloat16), w2,
                     preferred_element_type=jnp.float32) + b2
        x = _layer_norm(h1 + ff, g2, be2)

    # last_hidden_state.mean(1): torch averages over ALL S tokens (pads included).
    pooled = jnp.mean(x, axis=0, keepdims=True)                           # (1, H)
    reg_w = p_ref[R_REG_W:R_REG_W + 1, 0:H]
    reg_b = p_ref[R_REG_B:R_REG_B + 1, 0:1]
    y = jnp.sum(pooled * reg_w, axis=-1, keepdims=True) + reg_b           # (1, 1)
    # lane-dense, (8,128)-aligned output slab; wrapper reads [:, 0, :1]
    o_ref[...] = jnp.broadcast_to(jnp.exp(y).reshape(1, 1, 1), (1, S, OUT_LANES))


# --------------------------------- wrapper ----------------------------------

def bert_length_forward(params, ids, mask, token_type_ids, position_ids=None):
    # Embedding gathers are glue (plain JAX). BERT builds its own position ids
    # internally; the position_ids argument is unused, as in the module.
    pos = jnp.arange(S, dtype=jnp.int32)
    x = (params["word_emb"][ids]
         + params["pos_emb"][pos][None, :, :]
         + params["type_emb"][token_type_ids]).astype(jnp.float32)        # (B, S, H)

    # Additive attention mask for the block-diagonal fused-head score matrix:
    # off-diagonal (cross-head) blocks masked out + per-key padding mask.
    head_id = jnp.repeat(jnp.arange(NUM_HEADS), S)                        # (NH*S,)
    block_diag = jnp.where(head_id[:, None] == head_id[None, :], 0.0, NEG_INF)
    key_bias = jnp.tile((1.0 - mask.astype(jnp.float32)) * NEG_INF, (1, NUM_HEADS))
    attn_mask = block_diag[None, :, :] + key_bias[:, None, :]             # (B, NH*S, NH*S)

    out = pl.pallas_call(
        fused_bert_kernel,
        out_shape=jax.ShapeDtypeStruct((B, S, OUT_LANES), jnp.float32),
        grid=(B,),
        in_specs=[
            pl.BlockSpec((1, S, H), lambda b: (b, 0, 0)),
            pl.BlockSpec((1, NUM_HEADS * S, NUM_HEADS * S), lambda b: (b, 0, 0)),
            pl.BlockSpec((W_SLAB_ROWS, SLAB_LANES), lambda b: (0, 0)),
            pl.BlockSpec((P_SLAB_ROWS, SLAB_LANES), lambda b: (0, 0)),
        ],
        out_specs=pl.BlockSpec((1, S, OUT_LANES), lambda b: (b, 0, 0)),
        compiler_params=pltpu.CompilerParams(dimension_semantics=("parallel",)),
    )(x, attn_mask, params["w_slab"], params["p_slab"])

    regression_output = out[:, 0, :1]                                     # (B, 1)
    return regression_output, 0


# --------------------------- deterministic init ------------------------------

def _pad_lanes(a, width=SLAB_LANES):
    return jnp.pad(a, ((0, 0), (0, width - a.shape[-1])))


def init_params(key):
    def dense(k, shape):
        return jax.random.normal(k, shape, jnp.float32) * 0.02

    keys = jax.random.split(key, 4 + NUM_LAYERS)

    w_rows, p_rows = [], []
    p_rows.append(_pad_lanes(jnp.ones((1, H), jnp.float32)))      # emb_ln_g
    p_rows.append(_pad_lanes(jnp.zeros((1, H), jnp.float32)))     # emb_ln_b

    for l in range(NUM_LAYERS):
        lk = jax.random.split(keys[4 + l], 6)
        wq, wk, wv = dense(lk[0], (H, H)), dense(lk[1], (H, H)), dense(lk[2], (H, H))
        w_rows.append(_pad_lanes(jnp.concatenate([wq, wk, wv], axis=1)))  # Wqkv (H,3H)
        w_rows.append(_pad_lanes(dense(lk[3], (H, H))))                    # Wo
        w_rows.append(_pad_lanes(dense(lk[4], (H, FFN))))                  # W1
        w_rows.append(_pad_lanes(dense(lk[5], (FFN, H))))                  # W2

        p_rows.append(_pad_lanes(jnp.zeros((1, 3 * H), jnp.float32)))      # bqkv
        p_rows.append(_pad_lanes(jnp.zeros((1, H), jnp.float32)))          # bo
        p_rows.append(_pad_lanes(jnp.ones((1, H), jnp.float32)))           # g1
        p_rows.append(_pad_lanes(jnp.zeros((1, H), jnp.float32)))          # be1
        p_rows.append(_pad_lanes(jnp.zeros((1, FFN), jnp.float32)))        # b1
        p_rows.append(_pad_lanes(jnp.zeros((1, H), jnp.float32)))          # b2
        p_rows.append(_pad_lanes(jnp.ones((1, H), jnp.float32)))           # g2
        p_rows.append(_pad_lanes(jnp.zeros((1, H), jnp.float32)))          # be2

    p_rows.append(_pad_lanes(dense(keys[3], (1, H))))                      # reg_w (Linear(H,1))
    p_rows.append(_pad_lanes(jnp.zeros((1, 1), jnp.float32)))              # reg_b

    p_slab = jnp.concatenate(p_rows, axis=0)
    pad_rows = P_SLAB_ROWS - p_slab.shape[0]
    if pad_rows:
        p_slab = jnp.pad(p_slab, ((0, pad_rows), (0, 0)))

    return {
        "word_emb": dense(keys[0], (VOCAB, H)),
        "pos_emb": dense(keys[1], (MAX_POS, H)),
        "type_emb": dense(keys[2], (TYPE_VOCAB, H)),
        "w_slab": jnp.concatenate(w_rows, axis=0).astype(jnp.bfloat16),   # (320, 128)
        "p_slab": p_slab,                                                  # (24, 128)
    }


if __name__ == "__main__":
    key = jax.random.PRNGKey(0)
    pkey, ikey = jax.random.split(key, 2)
    params = init_params(pkey)

    ids = jax.random.randint(ikey, (B, S), 0, VOCAB, dtype=jnp.int32)
    mask = jnp.ones((B, S), jnp.int32).at[:, S - 2:].set(0)       # last 2 tokens padded
    token_type_ids = jnp.zeros((B, S), jnp.int32)
    position_ids = jnp.tile(jnp.arange(S, dtype=jnp.int32)[None, :], (B, 1))

    fwd = jax.jit(bert_length_forward)
    regression_output, aux = fwd(params, ids, mask, token_type_ids, position_ids)
    jax.block_until_ready(regression_output)

    assert regression_output.shape == (B, 1)
    assert regression_output.dtype == jnp.float32
    assert bool(jnp.all(regression_output > 0))   # exp output is positive
    print("KERNEL_OK")
</pallas_src>

<mosaic_0001>
module attributes {stable_mosaic.version = 11 : i64} {
  func.func @fused_bert_kernel(%arg0: i32, %arg1: memref<1x8x32xf32, #tpu.memory_space<vmem>>, %arg2: memref<1x32x32xf32, #tpu.memory_space<vmem>>, %arg3: memref<320x128xbf16, #tpu.memory_space<vmem>>, %arg4: memref<24x128xf32, #tpu.memory_space<vmem>>, %arg5: memref<1x8x128xf32, #tpu.memory_space<vmem>>) attributes {dimension_semantics = [#tpu.dimension_semantics<parallel>], iteration_bounds = array<i64: 2>, scalar_prefetch = 0 : i64, scratch_operands = 0 : i64, tpu.core_type = #tpu.core_type<tc>, window_params = [{transform_indices = @transform_0, window_bounds = array<i64: 1, 8, 32>}, {transform_indices = @transform_1, window_bounds = array<i64: 1, 32, 32>}, {pipeline_mode = #tpu.pipeline_mode<synchronous>, transform_indices = @transform_2, window_bounds = array<i64: 320, 128>}, {pipeline_mode = #tpu.pipeline_mode<synchronous>, transform_indices = @transform_3, window_bounds = array<i64: 24, 128>}, {transform_indices = @transform_4, window_bounds = array<i64: 1, 8, 128>}]} {
    %c0 = arith.constant 0 : index
    %c0_0 = arith.constant 0 : index
    %c0_1 = arith.constant 0 : index
    %0 = vector.load %arg1[%c0, %c0_0, %c0_1] : memref<1x8x32xf32, #tpu.memory_space<vmem>>, vector<1x8x32xf32>
    %1 = vector.shape_cast %0 : vector<1x8x32xf32> to vector<8x32xf32>
    %c0_2 = arith.constant 0 : index
    %c0_3 = arith.constant 0 : index
    %c0_4 = arith.constant 0 : index
    %2 = vector.load %arg2[%c0_2, %c0_3, %c0_4] : memref<1x32x32xf32, #tpu.memory_space<vmem>>, vector<1x32x32xf32>
    %3 = vector.shape_cast %2 : vector<1x32x32xf32> to vector<32x32xf32>
    %c0_5 = arith.constant 0 : index
    %c0_6 = arith.constant 0 : index
    %4 = vector.load %arg4[%c0_5, %c0_6] : memref<24x128xf32, #tpu.memory_space<vmem>>, vector<1x32xf32>
    %c1 = arith.constant 1 : index
    %c0_7 = arith.constant 0 : index
    %5 = vector.load %arg4[%c1, %c0_7] : memref<24x128xf32, #tpu.memory_space<vmem>>, vector<1x32xf32>
    %cst = arith.constant dense<0.000000e+00> : vector<8xf32>
    %6 = vector.multi_reduction <add>, %1, %cst [1] : vector<8x32xf32> to vector<8xf32>
    %7 = vector.shape_cast %6 : vector<8xf32> to vector<8x1xf32>
    %cst_8 = arith.constant 3.200000e+01 : f32
    %8 = vector.broadcast %cst_8 : f32 to vector<8x1xf32>
    %9 = arith.divf %7, %8 : vector<8x1xf32>
    %10 = vector.broadcast %9 : vector<8x1xf32> to vector<8x32xf32>
    %11 = arith.subf %1, %10 : vector<8x32xf32>
    %12 = arith.mulf %11, %11 : vector<8x32xf32>
    %cst_9 = arith.constant dense<0.000000e+00> : vector<8xf32>
    %13 = vector.multi_reduction <add>, %12, %cst_9 [1] : vector<8x32xf32> to vector<8xf32>
    %14 = vector.shape_cast %13 : vector<8xf32> to vector<8x1xf32>
    %cst_10 = arith.constant 3.200000e+01 : f32
    %15 = vector.broadcast %cst_10 : f32 to vector<8x1xf32>
    %16 = arith.divf %14, %15 : vector<8x1xf32>
    %17 = vector.broadcast %9 : vector<8x1xf32> to vector<8x32xf32>
    %18 = arith.subf %1, %17 : vector<8x32xf32>
    %cst_11 = arith.constant 9.99999996E-13 : f32
    %19 = vector.broadcast %cst_11 : f32 to vector<8x1xf32>
    %20 = arith.addf %16, %19 : vector<8x1xf32>
    %21 = math.rsqrt %20 : vector<8x1xf32>
    %22 = vector.broadcast %21 : vector<8x1xf32> to vector<8x32xf32>
    %23 = arith.mulf %18, %22 : vector<8x32xf32>
    %24 = vector.broadcast %4 : vector<1x32xf32> to vector<8x32xf32>
    %25 = arith.mulf %23, %24 : vector<8x32xf32>
    %26 = vector.broadcast %5 : vector<1x32xf32> to vector<8x32xf32>
    %27 = arith.addf %25, %26 : vector<8x32xf32>
    %c0_12 = arith.constant 0 : index
    %c0_13 = arith.constant 0 : index
    %28 = vector.load %arg3[%c0_12, %c0_13] : memref<320x128xbf16, #tpu.memory_space<vmem>>, vector<32x96xbf16>
    %c32 = arith.constant 32 : index
    %c0_14 = arith.constant 0 : index
    %29 = vector.load %arg3[%c32, %c0_14] : memref<320x128xbf16, #tpu.memory_space<vmem>>, vector<32x32xbf16>
    %c64 = arith.constant 64 : index
    %c0_15 = arith.constant 0 : index
    %30 = vector.load %arg3[%c64, %c0_15] : memref<320x128xbf16, #tpu.memory_space<vmem>>, vector<32x64xbf16>
    %c96 = arith.constant 96 : index
    %c0_16 = arith.constant 0 : index
    %31 = vector.load %arg3[%c96, %c0_16] : memref<320x128xbf16, #tpu.memory_space<vmem>>, vector<64x32xbf16>
    %c2 = arith.constant 2 : index
    %c0_17 = arith.constant 0 : index
    %32 = vector.load %arg4[%c2, %c0_17] : memref<24x128xf32, #tpu.memory_space<vmem>>, vector<1x96xf32>
    %c3 = arith.constant 3 : index
    %c0_18 = arith.constant 0 : index
    %33 = vector.load %arg4[%c3, %c0_18] : memref<24x128xf32, #tpu.memory_space<vmem>>, vector<1x32xf32>
    %c4 = arith.constant 4 : index
    %c0_19 = arith.constant 0 : index
    %34 = vector.load %arg4[%c4, %c0_19] : memref<24x128xf32, #tpu.memory_space<vmem>>, vector<1x32xf32>
    %c5 = arith.constant 5 : index
    %c0_20 = arith.constant 0 : index
    %35 = vector.load %arg4[%c5, %c0_20] : memref<24x128xf32, #tpu.memory_space<vmem>>, vector<1x32xf32>
    %c6 = arith.constant 6 : index
    %c0_21 = arith.constant 0 : index
    %36 = vector.load %arg4[%c6, %c0_21] : memref<24x128xf32, #tpu.memory_space<vmem>>, vector<1x64xf32>
    %c7 = arith.constant 7 : index
    %c0_22 = arith.constant 0 : index
    %37 = vector.load %arg4[%c7, %c0_22] : memref<24x128xf32, #tpu.memory_space<vmem>>, vector<1x32xf32>
    %c8 = arith.constant 8 : index
    %c0_23 = arith.constant 0 : index
    %38 = vector.load %arg4[%c8, %c0_23] : memref<24x128xf32, #tpu.memory_space<vmem>>, vector<1x32xf32>
    %c9 = arith.constant 9 : index
    %c0_24 = arith.constant 0 : index
    %39 = vector.load %arg4[%c9, %c0_24] : memref<24x128xf32, #tpu.memory_space<vmem>>, vector<1x32xf32>
    %40 = arith.truncf %27 : vector<8x32xf32> to vector<8x32xbf16>
    %cst_25 = arith.constant dense<0.000000e+00> : vector<8x96xf32>
    %41 = tpu.matmul %40, %28, %cst_25 {dimension_numbers = #tpu.dot_dimension_numbers<[1], [0], [0], [1], [0, 0, 1, 1], [], []>} : vector<8x32xbf16>, vector<32x96xbf16>, vector<8x96xf32> -> vector<8x96xf32>
    %42 = vector.broadcast %32 : vector<1x96xf32> to vector<8x96xf32>
    %43 = arith.addf %41, %42 : vector<8x96xf32>
    %44 = vector.extract_strided_slice %43 {offsets = [0, 0], sizes = [8, 8], strides = [1, 1]} : vector<8x96xf32> to vector<8x8xf32>
    %45 = vector.extract_strided_slice %43 {offsets = [0, 8], sizes = [8, 8], strides = [1, 1]} : vector<8x96xf32> to vector<8x8xf32>
    %46 = vector.extract_strided_slice %43 {offsets = [0, 16], sizes = [8, 8], strides = [1, 1]} : vector<8x96xf32> to vector<8x8xf32>
    %47 = vector.extract_strided_slice %43 {offsets = [0, 24], sizes = [8, 8], strides = [1, 1]} : vector<8x96xf32> to vector<8x8xf32>
    %48 = tpu.concatenate %44, %45, %46, %47 in 0 : vector<8x8xf32>, vector<8x8xf32>, vector<8x8xf32>, vector<8x8xf32> -> vector<32x8xf32>
    %49 = vector.extract_strided_slice %43 {offsets = [0, 32], sizes = [8, 8], strides = [1, 1]} : vector<8x96xf32> to vector<8x8xf32>
    %50 = vector.extract_strided_slice %43 {offsets = [0, 40], sizes = [8, 8], strides = [1, 1]} : vector<8x96xf32> to vector<8x8xf32>
    %51 = vector.extract_strided_slice %43 {offsets = [0, 48], sizes = [8, 8], strides = [1, 1]} : vector<8x96xf32> to vector<8x8xf32>
    %52 = vector.extract_strided_slice %43 {offsets = [0, 56], sizes = [8, 8], strides = [1, 1]} : vector<8x96xf32> to vector<8x8xf32>
    %53 = tpu.concatenate %49, %50, %51, %52 in 0 : vector<8x8xf32>, vector<8x8xf32>, vector<8x8xf32>, vector<8x8xf32> -> vector<32x8xf32>
    %54 = vector.extract_strided_slice %43 {offsets = [0, 64], sizes = [8, 8], strides = [1, 1]} : vector<8x96xf32> to vector<8x8xf32>
    %55 = vector.extract_strided_slice %43 {offsets = [0, 72], sizes = [8, 8], strides = [1, 1]} : vector<8x96xf32> to vector<8x8xf32>
    %56 = vector.extract_strided_slice %43 {offsets = [0, 80], sizes = [8, 8], strides = [1, 1]} : vector<8x96xf32> to vector<8x8xf32>
    %57 = vector.extract_strided_slice %43 {offsets = [0, 88], sizes = [8, 8], strides = [1, 1]} : vector<8x96xf32> to vector<8x8xf32>
    %58 = tpu.concatenate %54, %55, %56, %57 in 0 : vector<8x8xf32>, vector<8x8xf32>, vector<8x8xf32>, vector<8x8xf32> -> vector<32x8xf32>
    %cst_26 = arith.constant dense<0.000000e+00> : vector<32x32xf32>
    %59 = tpu.matmul %48, %53, %cst_26 {dimension_numbers = #tpu.dot_dimension_numbers<[1], [1], [0], [0], [0, 0, 1, 0], [], []>} : vector<32x8xf32>, vector<32x8xf32>, vector<32x32xf32> -> vector<32x32xf32>
    %cst_27 = arith.constant 0.353553385 : f32
    %60 = vector.broadcast %cst_27 : f32 to vector<32x32xf32>
    %61 = arith.mulf %59, %60 : vector<32x32xf32>
    %62 = arith.addf %61, %3 : vector<32x32xf32>
    %cst_28 = arith.constant dense<0xFF800000> : vector<32xf32>
    %63 = vector.multi_reduction <maximumf>, %62, %cst_28 [1] : vector<32x32xf32> to vector<32xf32>
    %64 = vector.shape_cast %63 : vector<32xf32> to vector<32x1xf32>
    %65 = vector.broadcast %64 : vector<32x1xf32> to vector<32x32xf32>
    %66 = arith.subf %62, %65 : vector<32x32xf32>
    %67 = math.exp %66 : vector<32x32xf32>
    %cst_29 = arith.constant dense<0.000000e+00> : vector<32xf32>
    %68 = vector.multi_reduction <add>, %67, %cst_29 [1] : vector<32x32xf32> to vector<32xf32>
    %69 = vector.shape_cast %68 : vector<32xf32> to vector<32x1xf32>
    %70 = tpu.reciprocal %69 {approx = true} : vector<32x1xf32> -> vector<32x1xf32>
    %71 = vector.broadcast %70 : vector<32x1xf32> to vector<32x32xf32>
    %72 = arith.mulf %67, %71 : vector<32x32xf32>
    %cst_30 = arith.constant dense<0.000000e+00> : vector<32x8xf32>
    %73 = tpu.matmul %72, %58, %cst_30 {dimension_numbers = #tpu.dot_dimension_numbers<[1], [0], [0], [1], [0, 0, 1, 1], [], []>} : vector<32x32xf32>, vector<32x8xf32>, vector<32x8xf32> -> vector<32x8xf32>
    %74 = vector.extract_strided_slice %73 {offsets = [0, 0], sizes = [8, 8], strides = [1, 1]} : vector<32x8xf32> to vector<8x8xf32>
    %75 = vector.extract_strided_slice %73 {offsets = [8, 0], sizes = [8, 8], strides = [1, 1]} : vector<32x8xf32> to vector<8x8xf32>
    %76 = vector.extract_strided_slice %73 {offsets = [16, 0], sizes = [8, 8], strides = [1, 1]} : vector<32x8xf32> to vector<8x8xf32>
    %77 = vector.extract_strided_slice %73 {offsets = [24, 0], sizes = [8, 8], strides = [1, 1]} : vector<32x8xf32> to vector<8x8xf32>
    %78 = tpu.concatenate %74, %75, %76, %77 in 1 : vector<8x8xf32>, vector<8x8xf32>, vector<8x8xf32>, vector<8x8xf32> -> vector<8x32xf32>
    %79 = arith.truncf %78 : vector<8x32xf32> to vector<8x32xbf16>
    %cst_31 = arith.constant dense<0.000000e+00> : vector<8x32xf32>
    %80 = tpu.matmul %79, %29, %cst_31 {dimension_numbers = #tpu.dot_dimension_numbers<[1], [0], [0], [1], [0, 0, 1, 1], [], []>} : vector<8x32xbf16>, vector<32x32xbf16>, vector<8x32xf32> -> vector<8x32xf32>
    %81 = vector.broadcast %33 : vector<1x32xf32> to vector<8x32xf32>
    %82 = arith.addf %80, %81 : vector<8x32xf32>
    %83 = arith.addf %27, %82 : vector<8x32xf32>
    %cst_32 = arith.constant dense<0.000000e+00> : vector<8xf32>
    %84 = vector.multi_reduction <add>, %83, %cst_32 [1] : vector<8x32xf32> to vector<8xf32>
    %85 = vector.shape_cast %84 : vector<8xf32> to vector<8x1xf32>
    %cst_33 = arith.constant 3.200000e+01 : f32
    %86 = vector.broadcast %cst_33 : f32 to vector<8x1xf32>
    %87 = arith.divf %85, %86 : vector<8x1xf32>
    %88 = vector.broadcast %87 : vector<8x1xf32> to vector<8x32xf32>
    %89 = arith.subf %83, %88 : vector<8x32xf32>
    %90 = arith.mulf %89, %89 : vector<8x32xf32>
    %cst_34 = arith.constant dense<0.000000e+00> : vector<8xf32>
    %91 = vector.multi_reduction <add>, %90, %cst_34 [1] : vector<8x32xf32> to vector<8xf32>
    %92 = vector.shape_cast %91 : vector<8xf32> to vector<8x1xf32>
    %cst_35 = arith.constant 3.200000e+01 : f32
    %93 = vector.broadcast %cst_35 : f32 to vector<8x1xf32>
    %94 = arith.divf %92, %93 : vector<8x1xf32>
    %95 = vector.broadcast %87 : vector<8x1xf32> to vector<8x32xf32>
    %96 = arith.subf %83, %95 : vector<8x32xf32>
    %cst_36 = arith.constant 9.99999996E-13 : f32
    %97 = vector.broadcast %cst_36 : f32 to vector<8x1xf32>
    %98 = arith.addf %94, %97 : vector<8x1xf32>
    %99 = math.rsqrt %98 : vector<8x1xf32>
    %100 = vector.broadcast %99 : vector<8x1xf32> to vector<8x32xf32>
    %101 = arith.mulf %96, %100 : vector<8x32xf32>
    %102 = vector.broadcast %34 : vector<1x32xf32> to vector<8x32xf32>
    %103 = arith.mulf %101, %102 : vector<8x32xf32>
    %104 = vector.broadcast %35 : vector<1x32xf32> to vector<8x32xf32>
    %105 = arith.addf %103, %104 : vector<8x32xf32>
    %106 = arith.truncf %105 : vector<8x32xf32> to vector<8x32xbf16>
    %cst_37 = arith.constant dense<0.000000e+00> : vector<8x64xf32>
    %107 = tpu.matmul %106, %30, %cst_37 {dimension_numbers = #tpu.dot_dimension_numbers<[1], [0], [0], [1], [0, 0, 1, 1], [], []>} : vector<8x32xbf16>, vector<32x64xbf16>, vector<8x64xf32> -> vector<8x64xf32>
    %108 = vector.broadcast %36 : vector<1x64xf32> to vector<8x64xf32>
    %109 = arith.addf %107, %108 : vector<8x64xf32>
    %cst_38 = arith.constant 5.000000e-01 : f32
    %110 = vector.broadcast %cst_38 : f32 to vector<8x64xf32>
    %111 = arith.mulf %110, %109 : vector<8x64xf32>
    %cst_39 = arith.constant 0.707106769 : f32
    %112 = vector.broadcast %cst_39 : f32 to vector<8x64xf32>
    %113 = arith.mulf %109, %112 : vector<8x64xf32>
    %cst_40 = arith.constant 0.000000e+00 : f32
    %114 = vector.broadcast %cst_40 : f32 to vector<8x64xf32>
    %115 = arith.cmpf oge, %113, %114 : vector<8x64xf32>
    %cst_41 = arith.constant 1.000000e+00 : f32
    %cst_42 = arith.constant -1.000000e+00 : f32
    %116 = vector.broadcast %cst_41 : f32 to vector<8x64xf32>
    %117 = vector.broadcast %cst_42 : f32 to vector<8x64xf32>
    %118 = arith.select %115, %116, %117 : vector<8x64xi1>, vector<8x64xf32>
    %119 = math.absf %113 : vector<8x64xf32>
    %cst_43 = arith.constant 0.327591091 : f32
    %120 = vector.broadcast %cst_43 : f32 to vector<8x64xf32>
    %121 = arith.mulf %120, %119 : vector<8x64xf32>
    %cst_44 = arith.constant 1.000000e+00 : f32
    %122 = vector.broadcast %cst_44 : f32 to vector<8x64xf32>
    %123 = arith.addf %122, %121 : vector<8x64xf32>
    %cst_45 = arith.constant 1.000000e+00 : f32
    %124 = vector.broadcast %cst_45 : f32 to vector<8x64xf32>
    %125 = arith.divf %124, %123 : vector<8x64xf32>
    %cst_46 = arith.constant 1.06140542 : f32
    %126 = vector.broadcast %cst_46 : f32 to vector<8x64xf32>
    %127 = arith.mulf %126, %125 : vector<8x64xf32>
    %cst_47 = arith.constant -1.45315206 : f32
    %128 = vector.broadcast %cst_47 : f32 to vector<8x64xf32>
    %129 = arith.addf %127, %128 : vector<8x64xf32>
    %130 = arith.mulf %129, %125 : vector<8x64xf32>
    %cst_48 = arith.constant 1.42141378 : f32
    %131 = vector.broadcast %cst_48 : f32 to vector<8x64xf32>
    %132 = arith.addf %130, %131 : vector<8x64xf32>
    %133 = arith.mulf %132, %125 : vector<8x64xf32>
    %cst_49 = arith.constant -0.284496725 : f32
    %134 = vector.broadcast %cst_49 : f32 to vector<8x64xf32>
    %135 = arith.addf %133, %134 : vector<8x64xf32>
    %136 = arith.mulf %135, %125 : vector<8x64xf32>
    %cst_50 = arith.constant 0.254829586 : f32
    %137 = vector.broadcast %cst_50 : f32 to vector<8x64xf32>
    %138 = arith.addf %136, %137 : vector<8x64xf32>
    %139 = arith.mulf %138, %125 : vector<8x64xf32>
    %cst_51 = arith.constant 0.000000e+00 : f32
    %140 = vector.broadcast %cst_51 : f32 to vector<8x64xf32>
    %141 = arith.subf %140, %119 : vector<8x64xf32>
    %142 = arith.mulf %141, %119 : vector<8x64xf32>
    %143 = math.exp %142 : vector<8x64xf32>
    %144 = arith.mulf %139, %143 : vector<8x64xf32>
    %cst_52 = arith.constant 1.000000e+00 : f32
    %145 = vector.broadcast %cst_52 : f32 to vector<8x64xf32>
    %146 = arith.subf %145, %144 : vector<8x64xf32>
    %147 = arith.mulf %118, %146 : vector<8x64xf32>
    %cst_53 = arith.constant 1.000000e+00 : f32
    %148 = vector.broadcast %cst_53 : f32 to vector<8x64xf32>
    %149 = arith.addf %148, %147 : vector<8x64xf32>
    %150 = arith.mulf %111, %149 : vector<8x64xf32>
    %151 = arith.truncf %150 : vector<8x64xf32> to vector<8x64xbf16>
    %cst_54 = arith.constant dense<0.000000e+00> : vector<8x32xf32>
    %152 = tpu.matmul %151, %31, %cst_54 {dimension_numbers = #tpu.dot_dimension_numbers<[1], [0], [0], [1], [0, 0, 1, 1], [], []>} : vector<8x64xbf16>, vector<64x32xbf16>, vector<8x32xf32> -> vector<8x32xf32>
    %153 = vector.broadcast %37 : vector<1x32xf32> to vector<8x32xf32>
    %154 = arith.addf %152, %153 : vector<8x32xf32>
    %155 = arith.addf %105, %154 : vector<8x32xf32>
    %cst_55 = arith.constant dense<0.000000e+00> : vector<8xf32>
    %156 = vector.multi_reduction <add>, %155, %cst_55 [1] : vector<8x32xf32> to vector<8xf32>
    %157 = vector.shape_cast %156 : vector<8xf32> to vector<8x1xf32>
    %cst_56 = arith.constant 3.200000e+01 : f32
    %158 = vector.broadcast %cst_56 : f32 to vector<8x1xf32>
    %159 = arith.divf %157, %158 : vector<8x1xf32>
    %160 = vector.broadcast %159 : vector<8x1xf32> to vector<8x32xf32>
    %161 = arith.subf %155, %160 : vector<8x32xf32>
    %162 = arith.mulf %161, %161 : vector<8x32xf32>
    %cst_57 = arith.constant dense<0.000000e+00> : vector<8xf32>
    %163 = vector.multi_reduction <add>, %162, %cst_57 [1] : vector<8x32xf32> to vector<8xf32>
    %164 = vector.shape_cast %163 : vector<8xf32> to vector<8x1xf32>
    %cst_58 = arith.constant 3.200000e+01 : f32
    %165 = vector.broadcast %cst_58 : f32 to vector<8x1xf32>
    %166 = arith.divf %164, %165 : vector<8x1xf32>
    %167 = vector.broadcast %159 : vector<8x1xf32> to vector<8x32xf32>
    %168 = arith.subf %155, %167 : vector<8x32xf32>
    %cst_59 = arith.constant 9.99999996E-13 : f32
    %169 = vector.broadcast %cst_59 : f32 to vector<8x1xf32>
    %170 = arith.addf %166, %169 : vector<8x1xf32>
    %171 = math.rsqrt %170 : vector<8x1xf32>
    %172 = vector.broadcast %171 : vector<8x1xf32> to vector<8x32xf32>
    %173 = arith.mulf %168, %172 : vector<8x32xf32>
    %174 = vector.broadcast %38 : vector<1x32xf32> to vector<8x32xf32>
    %175 = arith.mulf %173, %174 : vector<8x32xf32>
    %176 = vector.broadcast %39 : vector<1x32xf32> to vector<8x32xf32>
    %177 = arith.addf %175, %176 : vector<8x32xf32>
    %c160 = arith.constant 160 : index
    %c0_60 = arith.constant 0 : index
    %178 = vector.load %arg3[%c160, %c0_60] : memref<320x128xbf16, #tpu.memory_space<vmem>>, vector<32x96xbf16>
    %c192 = arith.constant 192 : index
    %c0_61 = arith.constant 0 : index
    %179 = vector.load %arg3[%c192, %c0_61] : memref<320x128xbf16, #tpu.memory_space<vmem>>, vector<32x32xbf16>
    %c224 = arith.constant 224 : index
    %c0_62 = arith.constant 0 : index
    %180 = vector.load %arg3[%c224, %c0_62] : memref<320x128xbf16, #tpu.memory_space<vmem>>, vector<32x64xbf16>
    %c256 = arith.constant 256 : index
    %c0_63 = arith.constant 0 : index
    %181 = vector.load %arg3[%c256, %c0_63] : memref<320x128xbf16, #tpu.memory_space<vmem>>, vector<64x32xbf16>
    %c10 = arith.constant 10 : index
    %c0_64 = arith.constant 0 : index
    %182 = vector.load %arg4[%c10, %c0_64] : memref<24x128xf32, #tpu.memory_space<vmem>>, vector<1x96xf32>
    %c11 = arith.constant 11 : index
    %c0_65 = arith.constant 0 : index
    %183 = vector.load %arg4[%c11, %c0_65] : memref<24x128xf32, #tpu.memory_space<vmem>>, vector<1x32xf32>
    %c12 = arith.constant 12 : index
    %c0_66 = arith.constant 0 : index
    %184 = vector.load %arg4[%c12, %c0_66] : memref<24x128xf32, #tpu.memory_space<vmem>>, vector<1x32xf32>
    %c13 = arith.constant 13 : index
    %c0_67 = arith.constant 0 : index
    %185 = vector.load %arg4[%c13, %c0_67] : memref<24x128xf32, #tpu.memory_space<vmem>>, vector<1x32xf32>
    %c14 = arith.constant 14 : index
    %c0_68 = arith.constant 0 : index
    %186 = vector.load %arg4[%c14, %c0_68] : memref<24x128xf32, #tpu.memory_space<vmem>>, vector<1x64xf32>
    %c15 = arith.constant 15 : index
    %c0_69 = arith.constant 0 : index
    %187 = vector.load %arg4[%c15, %c0_69] : memref<24x128xf32, #tpu.memory_space<vmem>>, vector<1x32xf32>
    %c16 = arith.constant 16 : index
    %c0_70 = arith.constant 0 : index
    %188 = vector.load %arg4[%c16, %c0_70] : memref<24x128xf32, #tpu.memory_space<vmem>>, vector<1x32xf32>
    %c17 = arith.constant 17 : index
    %c0_71 = arith.constant 0 : index
    %189 = vector.load %arg4[%c17, %c0_71] : memref<24x128xf32, #tpu.memory_space<vmem>>, vector<1x32xf32>
    %190 = arith.truncf %177 : vector<8x32xf32> to vector<8x32xbf16>
    %cst_72 = arith.constant dense<0.000000e+00> : vector<8x96xf32>
    %191 = tpu.matmul %190, %178, %cst_72 {dimension_numbers = #tpu.dot_dimension_numbers<[1], [0], [0], [1], [0, 0, 1, 1], [], []>} : vector<8x32xbf16>, vector<32x96xbf16>, vector<8x96xf32> -> vector<8x96xf32>
    %192 = vector.broadcast %182 : vector<1x96xf32> to vector<8x96xf32>
    %193 = arith.addf %191, %192 : vector<8x96xf32>
    %194 = vector.extract_strided_slice %193 {offsets = [0, 0], sizes = [8, 8], strides = [1, 1]} : vector<8x96xf32> to vector<8x8xf32>
    %195 = vector.extract_strided_slice %193 {offsets = [0, 8], sizes = [8, 8], strides = [1, 1]} : vector<8x96xf32> to vector<8x8xf32>
    %196 = vector.extract_strided_slice %193 {offsets = [0, 16], sizes = [8, 8], strides = [1, 1]} : vector<8x96xf32> to vector<8x8xf32>
    %197 = vector.extract_strided_slice %193 {offsets = [0, 24], sizes = [8, 8], strides = [1, 1]} : vector<8x96xf32> to vector<8x8xf32>
    %198 = tpu.concatenate %194, %195, %196, %197 in 0 : vector<8x8xf32>, vector<8x8xf32>, vector<8x8xf32>, vector<8x8xf32> -> vector<32x8xf32>
    %199 = vector.extract_strided_slice %193 {offsets = [0, 32], sizes = [8, 8], strides = [1, 1]} : vector<8x96xf32> to vector<8x8xf32>
    %200 = vector.extract_strided_slice %193 {offsets = [0, 40], sizes = [8, 8], strides = [1, 1]} : vector<8x96xf32> to vector<8x8xf32>
    %201 = vector.extract_strided_slice %193 {offsets = [0, 48], sizes = [8, 8], strides = [1, 1]} : vector<8x96xf32> to vector<8x8xf32>
    %202 = vector.extract_strided_slice %193 {offsets = [0, 56], sizes = [8, 8], strides = [1, 1]} : vector<8x96xf32> to vector<8x8xf32>
    %203 = tpu.concatenate %199, %200, %201, %202 in 0 : vector<8x8xf32>, vector<8x8xf32>, vector<8x8xf32>, vector<8x8xf32> -> vector<32x8xf32>
    %204 = vector.extract_strided_slice %193 {offsets = [0, 64], sizes = [8, 8], strides = [1, 1]} : vector<8x96xf32> to vector<8x8xf32>
    %205 = vector.extract_strided_slice %193 {offsets = [0, 72], sizes = [8, 8], strides = [1, 1]} : vector<8x96xf32> to vector<8x8xf32>
    %206 = vector.extract_strided_slice %193 {offsets = [0, 80], sizes = [8, 8], strides = [1, 1]} : vector<8x96xf32> to vector<8x8xf32>
    %207 = vector.extract_strided_slice %193 {offsets = [0, 88], sizes = [8, 8], strides = [1, 1]} : vector<8x96xf32> to vector<8x8xf32>
    %208 = tpu.concatenate %204, %205, %206, %207 in 0 : vector<8x8xf32>, vector<8x8xf32>, vector<8x8xf32>, vector<8x8xf32> -> vector<32x8xf32>
    %cst_73 = arith.constant dense<0.000000e+00> : vector<32x32xf32>
    %209 = tpu.matmul %198, %203, %cst_73 {dimension_numbers = #tpu.dot_dimension_numbers<[1], [1], [0], [0], [0, 0, 1, 0], [], []>} : vector<32x8xf32>, vector<32x8xf32>, vector<32x32xf32> -> vector<32x32xf32>
    %cst_74 = arith.constant 0.353553385 : f32
    %210 = vector.broadcast %cst_74 : f32 to vector<32x32xf32>
    %211 = arith.mulf %209, %210 : vector<32x32xf32>
    %212 = arith.addf %211, %3 : vector<32x32xf32>
    %cst_75 = arith.constant dense<0xFF800000> : vector<32xf32>
    %213 = vector.multi_reduction <maximumf>, %212, %cst_75 [1] : vector<32x32xf32> to vector<32xf32>
    %214 = vector.shape_cast %213 : vector<32xf32> to vector<32x1xf32>
    %215 = vector.broadcast %214 : vector<32x1xf32> to vector<32x32xf32>
    %216 = arith.subf %212, %215 : vector<32x32xf32>
    %217 = math.exp %216 : vector<32x32xf32>
    %cst_76 = arith.constant dense<0.000000e+00> : vector<32xf32>
    %218 = vector.multi_reduction <add>, %217, %cst_76 [1] : vector<32x32xf32> to vector<32xf32>
    %219 = vector.shape_cast %218 : vector<32xf32> to vector<32x1xf32>
    %220 = tpu.reciprocal %219 {approx = true} : vector<32x1xf32> -> vector<32x1xf32>
    %221 = vector.broadcast %220 : vector<32x1xf32> to vector<32x32xf32>
    %222 = arith.mulf %217, %221 : vector<32x32xf32>
    %cst_77 = arith.constant dense<0.000000e+00> : vector<32x8xf32>
    %223 = tpu.matmul %222, %208, %cst_77 {dimension_numbers = #tpu.dot_dimension_numbers<[1], [0], [0], [1], [0, 0, 1, 1], [], []>} : vector<32x32xf32>, vector<32x8xf32>, vector<32x8xf32> -> vector<32x8xf32>
    %224 = vector.extract_strided_slice %223 {offsets = [0, 0], sizes = [8, 8], strides = [1, 1]} : vector<32x8xf32> to vector<8x8xf32>
    %225 = vector.extract_strided_slice %223 {offsets = [8, 0], sizes = [8, 8], strides = [1, 1]} : vector<32x8xf32> to vector<8x8xf32>
    %226 = vector.extract_strided_slice %223 {offsets = [16, 0], sizes = [8, 8], strides = [1, 1]} : vector<32x8xf32> to vector<8x8xf32>
    %227 = vector.extract_strided_slice %223 {offsets = [24, 0], sizes = [8, 8], strides = [1, 1]} : vector<32x8xf32> to vector<8x8xf32>
    %228 = tpu.concatenate %224, %225, %226, %227 in 1 : vector<8x8xf32>, vector<8x8xf32>, vector<8x8xf32>, vector<8x8xf32> -> vector<8x32xf32>
    %229 = arith.truncf %228 : vector<8x32xf32> to vector<8x32xbf16>
    %cst_78 = arith.constant dense<0.000000e+00> : vector<8x32xf32>
    %230 = tpu.matmul %229, %179, %cst_78 {dimension_numbers = #tpu.dot_dimension_numbers<[1], [0], [0], [1], [0, 0, 1, 1], [], []>} : vector<8x32xbf16>, vector<32x32xbf16>, vector<8x32xf32> -> vector<8x32xf32>
    %231 = vector.broadcast %183 : vector<1x32xf32> to vector<8x32xf32>
    %232 = arith.addf %230, %231 : vector<8x32xf32>
    %233 = arith.addf %177, %232 : vector<8x32xf32>
    %cst_79 = arith.constant dense<0.000000e+00> : vector<8xf32>
    %234 = vector.multi_reduction <add>, %233, %cst_79 [1] : vector<8x32xf32> to vector<8xf32>
    %235 = vector.shape_cast %234 : vector<8xf32> to vector<8x1xf32>
    %cst_80 = arith.constant 3.200000e+01 : f32
    %236 = vector.broadcast %cst_80 : f32 to vector<8x1xf32>
    %237 = arith.divf %235, %236 : vector<8x1xf32>
    %238 = vector.broadcast %237 : vector<8x1xf32> to vector<8x32xf32>
    %239 = arith.subf %233, %238 : vector<8x32xf32>
    %240 = arith.mulf %239, %239 : vector<8x32xf32>
    %cst_81 = arith.constant dense<0.000000e+00> : vector<8xf32>
    %241 = vector.multi_reduction <add>, %240, %cst_81 [1] : vector<8x32xf32> to vector<8xf32>
    %242 = vector.shape_cast %241 : vector<8xf32> to vector<8x1xf32>
    %cst_82 = arith.constant 3.200000e+01 : f32
    %243 = vector.broadcast %cst_82 : f32 to vector<8x1xf32>
    %244 = arith.divf %242, %243 : vector<8x1xf32>
    %245 = vector.broadcast %237 : vector<8x1xf32> to vector<8x32xf32>
    %246 = arith.subf %233, %245 : vector<8x32xf32>
    %cst_83 = arith.constant 9.99999996E-13 : f32
    %247 = vector.broadcast %cst_83 : f32 to vector<8x1xf32>
    %248 = arith.addf %244, %247 : vector<8x1xf32>
    %249 = math.rsqrt %248 : vector<8x1xf32>
    %250 = vector.broadcast %249 : vector<8x1xf32> to vector<8x32xf32>
    %251 = arith.mulf %246, %250 : vector<8x32xf32>
    %252 = vector.broadcast %184 : vector<1x32xf32> to vector<8x32xf32>
    %253 = arith.mulf %251, %252 : vector<8x32xf32>
    %254 = vector.broadcast %185 : vector<1x32xf32> to vector<8x32xf32>
    %255 = arith.addf %253, %254 : vector<8x32xf32>
    %256 = arith.truncf %255 : vector<8x32xf32> to vector<8x32xbf16>
    %cst_84 = arith.constant dense<0.000000e+00> : vector<8x64xf32>
    %257 = tpu.matmul %256, %180, %cst_84 {dimension_numbers = #tpu.dot_dimension_numbers<[1], [0], [0], [1], [0, 0, 1, 1], [], []>} : vector<8x32xbf16>, vector<32x64xbf16>, vector<8x64xf32> -> vector<8x64xf32>
    %258 = vector.broadcast %186 : vector<1x64xf32> to vector<8x64xf32>
    %259 = arith.addf %257, %258 : vector<8x64xf32>
    %cst_85 = arith.constant 5.000000e-01 : f32
    %260 = vector.broadcast %cst_85 : f32 to vector<8x64xf32>
    %261 = arith.mulf %260, %259 : vector<8x64xf32>
    %cst_86 = arith.constant 0.707106769 : f32
    %262 = vector.broadcast %cst_86 : f32 to vector<8x64xf32>
    %263 = arith.mulf %259, %262 : vector<8x64xf32>
    %cst_87 = arith.constant 0.000000e+00 : f32
    %264 = vector.broadcast %cst_87 : f32 to vector<8x64xf32>
    %265 = arith.cmpf oge, %263, %264 : vector<8x64xf32>
    %cst_88 = arith.constant 1.000000e+00 : f32
    %cst_89 = arith.constant -1.000000e+00 : f32
    %266 = vector.broadcast %cst_88 : f32 to vector<8x64xf32>
    %267 = vector.broadcast %cst_89 : f32 to vector<8x64xf32>
    %268 = arith.select %265, %266, %267 : vector<8x64xi1>, vector<8x64xf32>
    %269 = math.absf %263 : vector<8x64xf32>
    %cst_90 = arith.constant 0.327591091 : f32
    %270 = vector.broadcast %cst_90 : f32 to vector<8x64xf32>
    %271 = arith.mulf %270, %269 : vector<8x64xf32>
    %cst_91 = arith.constant 1.000000e+00 : f32
    %272 = vector.broadcast %cst_91 : f32 to vector<8x64xf32>
    %273 = arith.addf %272, %271 : vector<8x64xf32>
    %cst_92 = arith.constant 1.000000e+00 : f32
    %274 = vector.broadcast %cst_92 : f32 to vector<8x64xf32>
    %275 = arith.divf %274, %273 : vector<8x64xf32>
    %cst_93 = arith.constant 1.06140542 : f32
    %276 = vector.broadcast %cst_93 : f32 to vector<8x64xf32>
    %277 = arith.mulf %276, %275 : vector<8x64xf32>
    %cst_94 = arith.constant -1.45315206 : f32
    %278 = vector.broadcast %cst_94 : f32 to vector<8x64xf32>
    %279 = arith.addf %277, %278 : vector<8x64xf32>
    %280 = arith.mulf %279, %275 : vector<8x64xf32>
    %cst_95 = arith.constant 1.42141378 : f32
    %281 = vector.broadcast %cst_95 : f32 to vector<8x64xf32>
    %282 = arith.addf %280, %281 : vector<8x64xf32>
    %283 = arith.mulf %282, %275 : vector<8x64xf32>
    %cst_96 = arith.constant -0.284496725 : f32
    %284 = vector.broadcast %cst_96 : f32 to vector<8x64xf32>
    %285 = arith.addf %283, %284 : vector<8x64xf32>
    %286 = arith.mulf %285, %275 : vector<8x64xf32>
    %cst_97 = arith.constant 0.254829586 : f32
    %287 = vector.broadcast %cst_97 : f32 to vector<8x64xf32>
    %288 = arith.addf %286, %287 : vector<8x64xf32>
    %289 = arith.mulf %288, %275 : vector<8x64xf32>
    %cst_98 = arith.constant 0.000000e+00 : f32
    %290 = vector.broadcast %cst_98 : f32 to vector<8x64xf32>
    %291 = arith.subf %290, %269 : vector<8x64xf32>
    %292 = arith.mulf %291, %269 : vector<8x64xf32>
    %293 = math.exp %292 : vector<8x64xf32>
    %294 = arith.mulf %289, %293 : vector<8x64xf32>
    %cst_99 = arith.constant 1.000000e+00 : f32
    %295 = vector.broadcast %cst_99 : f32 to vector<8x64xf32>
    %296 = arith.subf %295, %294 : vector<8x64xf32>
    %297 = arith.mulf %268, %296 : vector<8x64xf32>
    %cst_100 = arith.constant 1.000000e+00 : f32
    %298 = vector.broadcast %cst_100 : f32 to vector<8x64xf32>
    %299 = arith.addf %298, %297 : vector<8x64xf32>
    %300 = arith.mulf %261, %299 : vector<8x64xf32>
    %301 = arith.truncf %300 : vector<8x64xf32> to vector<8x64xbf16>
    %cst_101 = arith.constant dense<0.000000e+00> : vector<8x32xf32>
    %302 = tpu.matmul %301, %181, %cst_101 {dimension_numbers = #tpu.dot_dimension_numbers<[1], [0], [0], [1], [0, 0, 1, 1], [], []>} : vector<8x64xbf16>, vector<64x32xbf16>, vector<8x32xf32> -> vector<8x32xf32>
    %303 = vector.broadcast %187 : vector<1x32xf32> to vector<8x32xf32>
    %304 = arith.addf %302, %303 : vector<8x32xf32>
    %305 = arith.addf %255, %304 : vector<8x32xf32>
    %cst_102 = arith.constant dense<0.000000e+00> : vector<8xf32>
    %306 = vector.multi_reduction <add>, %305, %cst_102 [1] : vector<8x32xf32> to vector<8xf32>
    %307 = vector.shape_cast %306 : vector<8xf32> to vector<8x1xf32>
    %cst_103 = arith.constant 3.200000e+01 : f32
    %308 = vector.broadcast %cst_103 : f32 to vector<8x1xf32>
    %309 = arith.divf %307, %308 : vector<8x1xf32>
    %310 = vector.broadcast %309 : vector<8x1xf32> to vector<8x32xf32>
    %311 = arith.subf %305, %310 : vector<8x32xf32>
    %312 = arith.mulf %311, %311 : vector<8x32xf32>
    %cst_104 = arith.constant dense<0.000000e+00> : vector<8xf32>
    %313 = vector.multi_reduction <add>, %312, %cst_104 [1] : vector<8x32xf32> to vector<8xf32>
    %314 = vector.shape_cast %313 : vector<8xf32> to vector<8x1xf32>
    %cst_105 = arith.constant 3.200000e+01 : f32
    %315 = vector.broadcast %cst_105 : f32 to vector<8x1xf32>
    %316 = arith.divf %314, %315 : vector<8x1xf32>
    %317 = vector.broadcast %309 : vector<8x1xf32> to vector<8x32xf32>
    %318 = arith.subf %305, %317 : vector<8x32xf32>
    %cst_106 = arith.constant 9.99999996E-13 : f32
    %319 = vector.broadcast %cst_106 : f32 to vector<8x1xf32>
    %320 = arith.addf %316, %319 : vector<8x1xf32>
    %321 = math.rsqrt %320 : vector<8x1xf32>
    %322 = vector.broadcast %321 : vector<8x1xf32> to vector<8x32xf32>
    %323 = arith.mulf %318, %322 : vector<8x32xf32>
    %324 = vector.broadcast %188 : vector<1x32xf32> to vector<8x32xf32>
    %325 = arith.mulf %323, %324 : vector<8x32xf32>
    %326 = vector.broadcast %189 : vector<1x32xf32> to vector<8x32xf32>
    %327 = arith.addf %325, %326 : vector<8x32xf32>
    %cst_107 = arith.constant dense<0.000000e+00> : vector<32xf32>
    %328 = vector.multi_reduction <add>, %327, %cst_107 [0] : vector<8x32xf32> to vector<32xf32>
    %329 = vector.shape_cast %328 : vector<32xf32> to vector<1x32xf32>
    %cst_108 = arith.constant 8.000000e+00 : f32
    %330 = vector.broadcast %cst_108 : f32 to vector<1x32xf32>
    %331 = arith.divf %329, %330 : vector<1x32xf32>
    %c18 = arith.constant 18 : index
    %c0_109 = arith.constant 0 : index
    %332 = vector.load %arg4[%c18, %c0_109] : memref<24x128xf32, #tpu.memory_space<vmem>>, vector<1x32xf32>
    %c19 = arith.constant 19 : index
    %c0_110 = arith.constant 0 : index
    %333 = vector.load %arg4[%c19, %c0_110] : memref<24x128xf32, #tpu.memory_space<vmem>>, vector<1x1xf32>
    %334 = arith.mulf %331, %332 : vector<1x32xf32>
    %cst_111 = arith.constant dense<0.000000e+00> : vector<1xf32>
    %335 = vector.multi_reduction <add>, %334, %cst_111 [1] : vector<1x32xf32> to vector<1xf32>
    %336 = vector.shape_cast %335 : vector<1xf32> to vector<1x1xf32>
    %337 = arith.addf %336, %333 : vector<1x1xf32>
    %338 = math.exp %337 : vector<1x1xf32>
    %339 = vector.shape_cast %338 : vector<1x1xf32> to vector<1x1x1xf32>
    %340 = vector.shape_cast %339 : vector<1x1x1xf32> to vector<1x1x1xf32>
    %341 = vector.broadcast %340 : vector<1x1x1xf32> to vector<1x8x128xf32>
    %c0_112 = arith.constant 0 : index
    %c0_113 = arith.constant 0 : index
    %c0_114 = arith.constant 0 : index
    %342 = vector.load %arg5[%c0_112, %c0_113, %c0_114] : memref<1x8x128xf32, #tpu.memory_space<vmem>>, vector<1x8x128xf32>
    tpu.vector_store %arg5[%c0_112, %c0_113, %c0_114], %341 {strides = array<i32>} : memref<1x8x128xf32, #tpu.memory_space<vmem>>, vector<1x8x128xf32>,
    return
  }
  func.func @transform_0(%arg0: i32) -> (i32, i32, i32) {
    %c0_i32 = arith.constant 0 : i32
    %c0_i32_0 = arith.constant 0 : i32
    %c0_i32_1 = arith.constant 0 : i32
    return %arg0, %c0_i32, %c0_i32_0 : i32, i32, i32
  }
  func.func @transform_1(%arg0: i32) -> (i32, i32, i32) {
    %c0_i32 = arith.constant 0 : i32
    %c0_i32_0 = arith.constant 0 : i32
    %c0_i32_1 = arith.constant 0 : i32
    return %arg0, %c0_i32, %c0_i32_0 : i32, i32, i32
  }
  func.func @transform_2(%arg0: i32) -> (i32, i32) {
    %c0_i32 = arith.constant 0 : i32
    %c0_i32_0 = arith.constant 0 : i32
    %c0_i32_1 = arith.constant 0 : i32
    return %c0_i32, %c0_i32_0 : i32, i32
  }
  func.func @transform_3(%arg0: i32) -> (i32, i32) {
    %c0_i32 = arith.constant 0 : i32
    %c0_i32_0 = arith.constant 0 : i32
    %c0_i32_1 = arith.constant 0 : i32
    return %c0_i32, %c0_i32_0 : i32, i32
  }
  func.func @transform_4(%arg0: i32) -> (i32, i32, i32) {
    %c0_i32 = arith.constant 0 : i32
    %c0_i32_0 = arith.constant 0 : i32
    %c0_i32_1 = arith.constant 0 : i32
    return %arg0, %c0_i32, %c0_i32_0 : i32, i32, i32
  }
}

</mosaic_0001>

<llo_original>
// kernel: bert_length_forward.1
$region0: #{bert_length_forward.1}
  #allocation0 [shape = 'u32[]', space=smem, size = 0x4, offset = 0x4, fixed_abs, tag = 'smem constant byte address 0x4 - core index']
  #allocation1 [shape = 'u32[144,128]{1,0:T(1,128)}', space=vmem, size = 0x12000, scoped, tag = 'internal scratch']
  %s0 = inlined_call_operand.vmem [shape: f32[2,8,32], index: 0, kind: input, shape index: {}]
  %s1 = inlined_call_operand.vmem [shape: f32[2,32,32], index: 1, kind: input, shape index: {}]
  %s2 = inlined_call_operand.vmem [shape: bf16[320,128], index: 2, kind: input, shape index: {}]
  %s3 = inlined_call_operand.vmem [shape: f32[24,128], index: 3, kind: input, shape index: {}]
  %s4 = inlined_call_operand.vmem [shape: f32[2,8,128], index: 4, kind: output, shape index: {}]
  %s5 = sld [smem:[#allocation0]]
  $region49: #{bert_length_forward.1} parent=0
    _
  %s7 = ssub.s32 1, %s5
  %s8 = scalar_select 0, %s7, %s5
  loop: start=0, step=1, limit=4
  $region2: #{bert_length_forward.1} parent=0 // loop_pre_header
    _
  $region3: #{bert_length_forward.1} parent=0 // loop_header
    %s10 = sphi 0, %s14
    %p11 = scmp.ge.s32.totalorder %s10, 4
    %s20 = sphi 0, %s22
    %s23 = sphi 0, %s20
    %s24 = sphi 0, %s23
    %s40 = sphi 0, %s24
    %s46 = sphi 0, %s48
    %s49 = sphi 0, %s46
    %s50 = sphi 0, %s49
    %s66 = sphi 0, %s50
    %s70 = sphi 0, %s70
    %s72 = sphi 0, %s70
    %s73 = sphi 0, %s72
    %s87 = sphi 0, %s73
    %s91 = sphi 0, %s91
    %s93 = sphi 0, %s91
    %s94 = sphi 0, %s93
    %s108 = sphi 0, %s94
    %s114 = sphi 0, %s116
    %s117 = sphi 0, %s114
    %s118 = sphi 0, %s117
    %s134 = sphi 0, %s118
  $region4: #{bert_length_forward.1} parent=0 // loop_header_branch
    %13 = sbr.rel (%p11) target = $region8
  $region5: #{bert_length_forward.1} parent=0 // loop_body
    %s15 = ssub.s32 %s10, 1
    %s16 = ssub.s32 %s10, 2
    %s17 = sadd.s32 %s10, 1
    %s18 = ssub.s32 %s10, %s17
    %p19 = scmp.eq.s32.totalorder %s18, 0
    %s21 = sadd.s32 %s20, 1
    %s22 = scalar_select %p19, %s20, %s21
    %p25 = pneg %p19
    %p26 = scmp.eq.s32.totalorder %s10, 1
    %p27 = por %p25, %p26
    %p28 = scmp.ne.s32.totalorder %s20, %s23
    %p29 = scmp.eq.s32.totalorder %s10, 0
    %p30 = por %p28, %p29
    %p31 = scmp.ne.s32.totalorder %s20, %s23
    %p32 = scmp.eq.s32.totalorder %s15, 1
    %p33 = por %p31, %p32
    %p34 = scmp.ne.s32.totalorder %s23, %s24
    %p35 = scmp.eq.s32.totalorder %s15, 0
    %p36 = por %p34, %p35
    %p37 = scmp.ne.s32.totalorder %s23, %s24
    %p38 = scmp.eq.s32.totalorder %s16, 1
    %p39 = por %p37, %p38
    %p41 = scmp.ne.s32.totalorder %s24, %s40
    %p42 = scmp.eq.s32.totalorder %s16, 0
    %p43 = por %p41, %p42
    %s44 = ssub.s32 %s10, %s17
    %p45 = scmp.eq.s32.totalorder %s44, 0
    %s47 = sadd.s32 %s46, 1
    %s48 = scalar_select %p45, %s46, %s47
    %p51 = pneg %p45
    %p52 = scmp.eq.s32.totalorder %s10, 1
    %p53 = por %p51, %p52
    %p54 = scmp.ne.s32.totalorder %s46, %s49
    %p55 = scmp.eq.s32.totalorder %s10, 0
    %p56 = por %p54, %p55
    %p57 = scmp.ne.s32.totalorder %s46, %s49
    %p58 = scmp.eq.s32.totalorder %s15, 1
    %p59 = por %p57, %p58
    %p60 = scmp.ne.s32.totalorder %s49, %s50
    %p61 = scmp.eq.s32.totalorder %s15, 0
    %p62 = por %p60, %p61
    %p63 = scmp.ne.s32.totalorder %s49, %s50
    %p64 = scmp.eq.s32.totalorder %s16, 1
    %p65 = por %p63, %p64
    %p67 = scmp.ne.s32.totalorder %s50, %s66
    %p68 = scmp.eq.s32.totalorder %s16, 0
    %p69 = por %p67, %p68
    %s71 = sadd.s32 %s70, 1
    %p74 = scmp.eq.s32.totalorder %s10, 1
    %p75 = scmp.ne.s32.totalorder %s70, %s72
    %p76 = scmp.eq.s32.totalorder %s10, 0
    %p77 = por %p75, %p76
    %p78 = scmp.ne.s32.totalorder %s70, %s72
    %p79 = scmp.eq.s32.totalorder %s15, 1
    %p80 = por %p78, %p79
    %p81 = scmp.ne.s32.totalorder %s72, %s73
    %p82 = scmp.eq.s32.totalorder %s15, 0
    %p83 = por %p81, %p82
    %p84 = scmp.ne.s32.totalorder %s72, %s73
    %p85 = scmp.eq.s32.totalorder %s16, 1
    %p86 = por %p84, %p85
    %p88 = scmp.ne.s32.totalorder %s73, %s87
    %p89 = scmp.eq.s32.totalorder %s16, 0
    %p90 = por %p88, %p89
    %s92 = sadd.s32 %s91, 1
    %p95 = scmp.eq.s32.totalorder %s10, 1
    %p96 = scmp.ne.s32.totalorder %s91, %s93
    %p97 = scmp.eq.s32.totalorder %s10, 0
    %p98 = por %p96, %p97
    %p99 = scmp.ne.s32.totalorder %s91, %s93
    %p100 = scmp.eq.s32.totalorder %s15, 1
    %p101 = por %p99, %p100
    %p102 = scmp.ne.s32.totalorder %s93, %s94
    %p103 = scmp.eq.s32.totalorder %s15, 0
    %p104 = por %p102, %p103
    %p105 = scmp.ne.s32.totalorder %s93, %s94
    %p106 = scmp.eq.s32.totalorder %s16, 1
    %p107 = por %p105, %p106
    %p109 = scmp.ne.s32.totalorder %s94, %s108
    %p110 = scmp.eq.s32.totalorder %s16, 0
    %p111 = por %p109, %p110
    %s112 = ssub.s32 %s10, %s17
    %p113 = scmp.eq.s32.totalorder %s112, 0
    %s115 = sadd.s32 %s114, 1
    %s116 = scalar_select %p113, %s114, %s115
    %p119 = pneg %p113
    %p120 = scmp.eq.s32.totalorder %s10, 1
    %p121 = por %p119, %p120
    %p122 = scmp.ne.s32.totalorder %s114, %s117
    %p123 = scmp.eq.s32.totalorder %s10, 0
    %p124 = por %p122, %p123
    %p125 = scmp.ne.s32.totalorder %s114, %s117
    %p126 = scmp.eq.s32.totalorder %s15, 1
    %p127 = por %p125, %p126
    %p128 = scmp.ne.s32.totalorder %s117, %s118
    %p129 = scmp.eq.s32.totalorder %s15, 0
    %p130 = por %p128, %p129
    %p131 = scmp.ne.s32.totalorder %s117, %s118
    %p132 = scmp.eq.s32.totalorder %s16, 1
    %p133 = por %p131, %p132
    %p135 = scmp.ne.s32.totalorder %s118, %s134
    %p136 = scmp.eq.s32.totalorder %s16, 0
    %p137 = por %p135, %p136
    %p138 = scmp.le.s32.totalorder 1, %s10
    %p139 = scmp.lt.s32.totalorder %s10, 3
    %p140 = pnand %p138, %p139
    %p141 = pneg %p140
    // Predicated region
    $region9: #{bert_length_forward.1} parent=5 // pred_check
      _
    $region10: #{bert_length_forward.1} parent=5 // pred_check_branch
      %143 = sbr.rel (%p140) target = $region12
    $region11: #{bert_length_forward.1} parent=5 // pred_region
      %s144 = ssub.s32 %s10, 1
      // Predicated region
      $region13: #{bert_length_forward.1} parent=11 // pred_check
        %p145 = pneg %p83
      $region14: #{bert_length_forward.1} parent=11 // pred_check_branch
        %147 = sbr.rel (%p145) target = $region16
      $region15: #{bert_length_forward.1} parent=11 // pred_region
        _
      $region16: #{bert_length_forward.1} parent=11 // pred_fallthru
        _
      // Predicated region
      $region17: #{bert_length_forward.1} parent=11 // pred_check
        %p148 = pneg %p104
      $region18: #{bert_length_forward.1} parent=11 // pred_check_branch
        %150 = sbr.rel (%p148) target = $region20
      $region19: #{bert_length_forward.1} parent=11 // pred_region
        _
      $region20: #{bert_length_forward.1} parent=11 // pred_fallthru
        _
    $region12: #{bert_length_forward.1} parent=5 // pred_fallthru
      _
    %p151 = scmp.lt.s32.totalorder %s10, 2
    // Predicated region
    $region21: #{bert_length_forward.1} parent=5 // pred_check
      %p152 = pneg %p151
    $region22: #{bert_length_forward.1} parent=5 // pred_check_branch
      %154 = sbr.rel (%p152) target = $region24
    $region23: #{bert_length_forward.1} parent=5 // pred_region
      // Predicated region
      $region25: #{bert_length_forward.1} parent=23 // pred_check
        %p155 = pneg %p30
      $region26: #{bert_length_forward.1} parent=23 // pred_check_branch
        %157 = sbr.rel (%p155) target = $region28
      $region27: #{bert_length_forward.1} parent=23 // pred_region
        %p158 = scmp.lt.s32.totalorder %s10, 1
        %s159 = scalar_select %p158, %s10, 1
        %s160 = smul.addr %s159, 8
        %s161 = scalar_lea.vmem %s0, %s160
      $region28: #{bert_length_forward.1} parent=23 // pred_fallthru
        _
      // Predicated region
      $region29: #{bert_length_forward.1} parent=23 // pred_check
        %p162 = pneg %p56
      $region30: #{bert_length_forward.1} parent=23 // pred_check_branch
        %164 = sbr.rel (%p162) target = $region32
      $region31: #{bert_length_forward.1} parent=23 // pred_region
        %p165 = scmp.lt.s32.totalorder %s10, 1
        %s166 = scalar_select %p165, %s10, 1
        %s167 = smul.addr %s166, 4
        %s168 = smul.addr %s167, 8
        %s169 = scalar_lea.vmem %s1, %s168
      $region32: #{bert_length_forward.1} parent=23 // pred_fallthru
        _
    $region24: #{bert_length_forward.1} parent=5 // pred_fallthru
      _
    %p170 = scmp.le.s32.totalorder 1, %s10
    %p171 = scmp.lt.s32.totalorder %s10, 3
    %p172 = pnand %p170, %p171
    %p173 = pneg %p172
    // Predicated region
    $region33: #{bert_length_forward.1} parent=5 // pred_check
      _
    $region34: #{bert_length_forward.1} parent=5 // pred_check_branch
      %175 = sbr.rel (%p172) target = $region36
    $region35: #{bert_length_forward.1} parent=5 // pred_region
      %s176 = ssub.s32 %s10, 1
      %p177 = scmp.lt.s32.totalorder %s15, 1
      %s178 = scalar_select %p177, %s15, 1
      %s179 = smul.addr %s178, 8
      %s180 = scalar_lea.vmem %s0, %s179
      %p181 = pneg %p36
      %p182 = pneg %p33
      %p183 = scmp.lt.s32.totalorder %s15, 1
      %s184 = scalar_select %p183, %s15, 1
      %s185 = smul.addr %s184, 4
      %s186 = smul.addr %s185, 8
      %s187 = scalar_lea.vmem %s1, %s186
      %p188 = pneg %p62
      %p189 = pneg %p59
      %p190 = pneg %p83
      %p191 = pneg %p80
      %p192 = pneg %p104
      %p193 = pneg %p101
      %p194 = pneg %p130
      %p195 = pneg %p127
      %p196 = scmp.lt.s32.totalorder %s15, 1
      %s197 = scalar_select %p196, %s15, 1
      %s198 = smul.addr %s197, 8
      %s199 = scalar_lea.vmem %s4, %s198
      %p200 = scmp.lt.s32.totalorder %s15, 1
      %s201 = scalar_select %p200, %s15, 1
      %s202 = smul.addr %s201, 8
      %s203 = scalar_lea.vmem %s0, %s202
      %p204 = scmp.lt.s32.totalorder %s15, 1
      %s205 = scalar_select %p204, %s15, 1
      %s206 = smul.addr %s205, 4
      %s207 = smul.addr %s206, 8
      %s208 = scalar_lea.vmem %s1, %s207
      %p209 = scmp.lt.s32.totalorder %s15, 1
      %s210 = scalar_select %p209, %s15, 1
      %s211 = smul.addr %s210, 8
      %s212 = scalar_lea.vmem %s4, %s211
      %v214 = vld [vmem:[%s203] sm:$0xff]
      %v215 = vld [vmem:[%s208] sm:$0xff]
      %v216 = vld [vmem:[%s208 + $0x8] sm:$0xff]
      %v217 = vld [vmem:[%s208 + $0x10] sm:$0xff]
      %v218 = vld [vmem:[%s208 + $0x18] sm:$0xff]
      %v219 = vld [vmem:[%s3] sm:$0x1]
      %v220 = vld [vmem:[%s3 + $0x1] sm:$0x1]
      %vm221 = vcmask 261120
      %v222 = vsel %vm221, %v214, 0.0
      %223 = vadd.xlane.f32.xlu0 %v222
      %v224 = vpop.xlane.xlu0 %223
      %v225 = vrcp.pop 32.0
      %v226 = vmul.f32 %v224, %v225
      %v227 = vsub.f32 %v214, %v226
      %v228 = vmul.f32 %v227, %v227
      %v229 = vsel %vm221, %v228, 0.0
      %230 = vadd.xlane.f32.xlu0 %v229
      %v231 = vpop.xlane.xlu0 %230
      %v232 = vmul.f32 %v231, %v225
      %v233 = vadd.f32 %v232, 1e-12
      %v234 = vrsqrt.pop %v233
      %v235 = vmul.f32 %v227, %v234
      %v236 = vlaneseq
      %v237 = vshrl.u32 %v236, 7
      %v238 = vsub.s32 0, %v237
      %v239 = vrot.slane %v219, %v238
      %v240 = vmul.f32 %v235, %v239
      %v241 = vlaneseq
      %v242 = vshrl.u32 %v241, 7
      %v243 = vsub.s32 0, %v242
      %v244 = vrot.slane %v220, %v243
      %v245 = vadd.f32 %v240, %v244
      %v246 = vld [vmem:[%s2] sm:$0xf]
      %v247 = vld [vmem:[%s2 + $0x4] sm:$0xf]
      %v248 = vld [vmem:[%s2 + $0x8] sm:$0xf]
      %v249 = vld [vmem:[%s2 + $0xc] sm:$0xf]
      %v250 = vld [vmem:[%s2 + $0x10] sm:$0xf]
      %v251 = vld [vmem:[%s2 + $0x14] sm:$0xf]
      %v252 = vld [vmem:[%s2 + $0x18] sm:$0xf]
      %v253 = vld [vmem:[%s2 + $0x1c] sm:$0xf]
      %v254 = vld [vmem:[%s2 + $0x20] sm:$0xf]
      %v255 = vld [vmem:[%s2 + $0x24] sm:$0xf]
      %v256 = vld [vmem:[%s2 + $0x28] sm:$0xf]
      %v257 = vld [vmem:[%s2 + $0x2c] sm:$0xf]
      %v258 = vld [vmem:[%s2 + $0x30] sm:$0xf]
      %v259 = vld [vmem:[%s2 + $0x34] sm:$0xf]
      %v260 = vld [vmem:[%s2 + $0x38] sm:$0xf]
      %v261 = vld [vmem:[%s2 + $0x3c] sm:$0xf]
      %v262 = vld [vmem:[%s2 + $0x40] sm:$0xf]
      %v263 = vld [vmem:[%s2 + $0x44] sm:$0xf]
      %v264 = vld [vmem:[%s2 + $0x48] sm:$0xf]
      %v265 = vld [vmem:[%s2 + $0x4c] sm:$0xf]
      %v266 = vld [vmem:[%s3 + $0x2] sm:$0x1]
      %v267 = vld [vmem:[%s3 + $0x3] sm:$0x1]
      %v268 = vld [vmem:[%s3 + $0x4] sm:$0x1]
      %v269 = vld [vmem:[%s3 + $0x5] sm:$0x1]
      %v270 = vld [vmem:[%s3 + $0x6] sm:$0x1]
      %v271 = vld [vmem:[%s3 + $0x7] sm:$0x1]
      %v272 = vld [vmem:[%s3 + $0x8] sm:$0x1]
      %v273 = vld [vmem:[%s3 + $0x9] sm:$0x1]
      %v274 = vpack.c.bf16 %v245, %v245
      %v275 = vlaneseq
      %v276 = vshrl.u32 %v275, 7
      %v277 = vsub.s32 0, %v276
      %v278 = vrot.slane %v266, %v277
      %v283 = vunpack.c.l.b16 %v246
      %v284 = vunpack.c.l.b16 %v247
      %v285 = vunpack.c.l.b16 %v248
      %v286 = vunpack.c.l.b16 %v249
      %v287 = vpack.c.b16 %v284, %v283
      %v288 = vpack.c.b16 %v286, %v285
      %v292 = vsel %vm221, %v274, 0
      %294 = vmatprep.subr.bf16.mxu0 0
      %295 = vmatpush1.bf16.msra.mxu0 %v287
      %296 = vmatprep.subr.bf16.mxu0 0
      %297 = vmatpush1.bf16.msra.mxu0 %v288
      %298 = vmatprep.subr.bf16.mxu0 0
      %299 = vmatpush1.bf16.msra.mxu0 0
      %300 = vmatprep.subr.bf16.mxu0 0
      %301 = vmatpush1.bf16.msra.mxu0 0
      %302 = vmatprep.subr.bf16.mxu0 0
      %303 = vmatpush1.bf16.msra.mxu0 0
      %304 = vmatprep.subr.bf16.mxu0 0
      %305 = vmatpush1.bf16.msra.mxu0 0
      %306 = vmatprep.subr.bf16.mxu0 0
      %307 = vmatpush1.bf16.msra.mxu0 0
      %308 = vmatprep.subr.bf16.mxu0 0
      %309 = vmatpush1.bf16.msra.mxu0 0
      %310 = vmatprep.subr.bf16.mxu0 0
      %311 = vmatpush1.bf16.msra.mxu0 0
      %312 = vmatprep.subr.bf16.mxu0 0
      %313 = vmatpush1.bf16.msra.mxu0 0
      %314 = vmatprep.subr.bf16.mxu0 0
      %315 = vmatpush1.bf16.msra.mxu0 0
      %316 = vmatprep.subr.bf16.mxu0 0
      %317 = vmatpush1.bf16.msra.mxu0 0
      %318 = vmatprep.subr.bf16.mxu0 0
      %319 = vmatpush1.bf16.msra.mxu0 0
      %320 = vmatprep.subr.bf16.mxu0 0
      %321 = vmatpush1.bf16.msra.mxu0 0
      %322 = vmatprep.subr.bf16.mxu0 0
      %323 = vmatpush1.bf16.msra.mxu0 0
      %324 = vmatprep.subr.bf16.mxu0 0
      %325 = vmatpush1.bf16.msra.mxu0 0
      %326 = vmatprep.mubr.bf16.mxu0 0
      %327 = vmatmul.mubr.bf16.gmra.mrb[0].mxu0 %v292
      %v328 = vpop.f32.mrb[0].mxu0
      %v329 = vadd.f32 %v278, %v328
      %v330 = vpop.f32.mrb[0].mxu0
      %v331 = vpop.f32.mrb[0].mxu0
      %v332 = vpop.f32.mrb[0].mxu0
      %333 = vdwg.mxu0
      %335 = vrot.lane.b32.xlu0 %v329, 120
      %v336 = vpop.permute.xlu0 %335
      %337 = vrot.lane.b32.xlu0 %v329, 112
      %v338 = vpop.permute.xlu0 %337
      %339 = vrot.lane.b32.xlu0 %v329, 104
      %v340 = vpop.permute.xlu0 %339
      %341 = vrot.lane.b32.xlu0 %v329, 96
      %v342 = vpop.permute.xlu0 %341
      %343 = vrot.lane.b32.xlu0 %v336, 96
      %v344 = vpop.permute.xlu0 %343
      %345 = vrot.lane.b32.xlu0 %v338, 96
      %v346 = vpop.permute.xlu0 %345
      %347 = vrot.lane.b32.xlu0 %v340, 96
      %v348 = vpop.permute.xlu0 %347
      %vm349 = vcmask 64512
      %v350 = vsel %vm349, %v329, 0
      %v352 = vsel %vm349, %v336, 0
      %v354 = vsel %vm349, %v338, 0
      %v356 = vsel %vm349, %v340, 0
      %v358 = vsel %vm349, %v342, 0
      %v360 = vsel %vm349, %v344, 0
      %v362 = vsel %vm349, %v346, 0
      %v364 = vsel %vm349, %v348, 0
      %366 = vmatprep.subr.mxu0 0.0
      %367 = vmatpush1.xpose.msra.mxu0 %v358
      %368 = vmatprep.subr.mxu0 0.0
      %369 = vmatpush1.xpose.msra.mxu0 %v360
      %370 = vmatprep.subr.mxu0 0.0
      %371 = vmatpush1.xpose.msra.mxu0 %v362
      %372 = vmatprep.subr.mxu0 0.0
      %373 = vmatpush1.xpose.msra.mxu0 %v364
      %374 = vmatprep.subr.mxu0 0.0
      %375 = vmatpush1.xpose.msra.mxu0 0.0
      %376 = vmatprep.subr.mxu0 0.0
      %377 = vmatpush1.xpose.msra.mxu0 0.0
      %378 = vmatprep.subr.mxu0 0.0
      %379 = vmatpush1.xpose.msra.mxu0 0.0
      %380 = vmatprep.subr.mxu0 0.0
      %381 = vmatpush1.xpose.msra.mxu0 0.0
      %382 = vmatprep.subr.mxu0 0.0
      %383 = vmatpush1.xpose.msra.mxu0 0.0
      %384 = vmatprep.subr.mxu0 0.0
      %385 = vmatpush1.xpose.msra.mxu0 0.0
      %386 = vmatprep.subr.mxu0 0.0
      %387 = vmatpush1.xpose.msra.mxu0 0.0
      %388 = vmatprep.subr.mxu0 0.0
      %389 = vmatpush1.xpose.msra.mxu0 0.0
      %390 = vmatprep.subr.mxu0 0.0
      %391 = vmatpush1.xpose.msra.mxu0 0.0
      %392 = vmatprep.subr.mxu0 0.0
      %393 = vmatpush1.xpose.msra.mxu0 0.0
      %394 = vmatprep.subr.mxu0 0.0
      %395 = vmatpush1.xpose.msra.mxu0 0.0
      %396 = vmatprep.subr.mxu0 0.0
      %397 = vmatpush1.xpose.msra.mxu0 0.0
      %398 = vmatprep.subr.mxu0 0.0
      %399 = vmatpush1.xpose.msra.mxu0 0.0
      %400 = vmatprep.subr.mxu0 0.0
      %401 = vmatpush1.xpose.msra.mxu0 0.0
      %402 = vmatprep.subr.mxu0 0.0
      %403 = vmatpush1.xpose.msra.mxu0 0.0
      %404 = vmatprep.subr.mxu0 0.0
      %405 = vmatpush1.xpose.msra.mxu0 0.0
      %406 = vmatprep.subr.mxu0 0.0
      %407 = vmatpush1.xpose.msra.mxu0 0.0
      %408 = vmatprep.subr.mxu0 0.0
      %409 = vmatpush1.xpose.msra.mxu0 0.0
      %410 = vmatprep.subr.mxu0 0.0
      %411 = vmatpush1.xpose.msra.mxu0 0.0
      %412 = vmatprep.subr.mxu0 0.0
      %413 = vmatpush1.xpose.msra.mxu0 0.0
      %414 = vmatprep.subr.mxu0 0.0
      %415 = vmatpush1.xpose.msra.mxu0 0.0
      %416 = vmatprep.subr.mxu0 0.0
      %417 = vmatpush1.xpose.msra.mxu0 0.0
      %418 = vmatprep.subr.mxu0 0.0
      %419 = vmatpush1.xpose.msra.mxu0 0.0
      %420 = vmatprep.subr.mxu0 0.0
      %421 = vmatpush1.xpose.msra.mxu0 0.0
      %422 = vmatprep.subr.mxu0 0.0
      %423 = vmatpush1.xpose.msra.mxu0 0.0
      %424 = vmatprep.subr.mxu0 0.0
      %425 = vmatpush1.xpose.msra.mxu0 0.0
      %426 = vmatprep.subr.mxu0 0.0
      %427 = vmatpush1.xpose.msra.mxu0 0.0
      %428 = vmatprep.subr.mxu0 0.0
      %429 = vmatpush1.xpose.msra.mxu0 0.0
      %430 = vmatprep.mubr.f32.mxu0 0.0
      %431 = vmatmul.mubr.f32.gmra.mrb[0].mxu0 %v350
      %v432 = vpop.f32.mrb[0].mxu0
      %v433 = vadd.f32 0.0, %v432
      %v434 = vpop.f32.mrb[0].mxu0
      %435 = vmatprep.mubr.f32.mxu0 0.0
      %436 = vmatmul.mubr.f32.gmra.mrb[0].mxu0 %v352
      %v437 = vpop.f32.mrb[0].mxu0
      %v438 = vadd.f32 0.0, %v437
      %v439 = vpop.f32.mrb[0].mxu0
      %440 = vmatprep.mubr.f32.mxu0 0.0
      %441 = vmatmul.mubr.f32.gmra.mrb[0].mxu0 %v354
      %v442 = vpop.f32.mrb[0].mxu0
      %v443 = vadd.f32 0.0, %v442
      %v444 = vpop.f32.mrb[0].mxu0
      %445 = vmatprep.mubr.f32.mxu0 0.0
      %446 = vmatmul.mubr.f32.gmra.mrb[0].mxu0 %v356
      %v447 = vpop.f32.mrb[0].mxu0
      %v448 = vadd.f32 0.0, %v447
      %v449 = vpop.f32.mrb[0].mxu0
      %450 = vdwg.mxu0
      %v451 = vmul.f32 %v433, 0.35355338
      %v452 = vmul.f32 %v438, 0.35355338
      %v453 = vmul.f32 %v443, 0.35355338
      %v454 = vmul.f32 %v448, 0.35355338
      %v455 = vadd.f32 %v451, %v215
      %v456 = vadd.f32 %v452, %v216
      %v457 = vadd.f32 %v453, %v217
      %v458 = vadd.f32 %v454, %v218
      %v459 = vsel %vm221, %v455, -inf
      %460 = vmax.xlane.f32.xlu0 %v459
      %v461 = vpop.xlane.xlu0 %460
      %v462 = vsel %vm221, %v456, -inf
      %463 = vmax.xlane.f32.xlu0 %v462
      %v464 = vpop.xlane.xlu0 %463
      %v465 = vsel %vm221, %v457, -inf
      %466 = vmax.xlane.f32.xlu0 %v465
      %v467 = vpop.xlane.xlu0 %466
      %v468 = vsel %vm221, %v458, -inf
      %469 = vmax.xlane.f32.xlu0 %v468
      %v470 = vpop.xlane.xlu0 %469
      %v471 = vsub.f32 %v455, %v461
      %v472 = vsub.f32 %v456, %v464
      %v473 = vsub.f32 %v457, %v467
      %v474 = vsub.f32 %v458, %v470
      %v475 = vmul.f32 %v471, 1.442695
      %v476 = vpow.pop %v475
      %v477 = vmul.f32 %v472, 1.442695
      %v478 = vpow.pop %v477
      %v479 = vmul.f32 %v473, 1.442695
      %v480 = vpow.pop %v479
      %v481 = vmul.f32 %v474, 1.442695
      %v482 = vpow.pop %v481
      %v483 = vsel %vm221, %v476, 0.0
      %484 = vadd.xlane.f32.xlu0 %v483
      %v485 = vpop.xlane.xlu0 %484
      %v486 = vsel %vm221, %v478, 0.0
      %487 = vadd.xlane.f32.xlu0 %v486
      %v488 = vpop.xlane.xlu0 %487
      %v489 = vsel %vm221, %v480, 0.0
      %490 = vadd.xlane.f32.xlu0 %v489
      %v491 = vpop.xlane.xlu0 %490
      %v492 = vsel %vm221, %v482, 0.0
      %493 = vadd.xlane.f32.xlu0 %v492
      %v494 = vpop.xlane.xlu0 %493
      %v495 = vrcp.pop %v485
      %v496 = vrcp.pop %v488
      %v497 = vrcp.pop %v491
      %v498 = vrcp.pop %v494
      %v499 = vmul.f32 %v476, %v495
      %v500 = vmul.f32 %v478, %v496
      %v501 = vmul.f32 %v480, %v497
      %v502 = vmul.f32 %v482, %v498
      %503 = vrot.lane.b32.xlu0 %v329, 64
      %v504 = vpop.permute.xlu0 %503
      %505 = vrot.lane.b32.xlu0 %v336, 64
      %v506 = vpop.permute.xlu0 %505
      %507 = vrot.lane.b32.xlu0 %v338, 64
      %v508 = vpop.permute.xlu0 %507
      %509 = vrot.lane.b32.xlu0 %v340, 64
      %v510 = vpop.permute.xlu0 %509
      %v516 = vsel %vm221, %v499, 0
      %v519 = vsel %vm221, %v500, 0
      %v522 = vsel %vm221, %v501, 0
      %v525 = vsel %vm221, %v502, 0
      %527 = vmatprep.subr.mxu0 0.0
      %528 = vmatpush1.msra.mxu0 %v504
      %529 = vmatprep.subr.mxu0 0.0
      %530 = vmatpush1.msra.mxu0 %v506
      %531 = vmatprep.subr.mxu0 0.0
      %532 = vmatpush1.msra.mxu0 %v508
      %533 = vmatprep.subr.mxu0 0.0
      %534 = vmatpush1.msra.mxu0 %v510
      %535 = vmatprep.subr.mxu0 0.0
      %536 = vmatpush1.msra.mxu0 0.0
      %537 = vmatprep.subr.mxu0 0.0
      %538 = vmatpush1.msra.mxu0 0.0
      %539 = vmatprep.subr.mxu0 0.0
      %540 = vmatpush1.msra.mxu0 0.0
      %541 = vmatprep.subr.mxu0 0.0
      %542 = vmatpush1.msra.mxu0 0.0
      %543 = vmatprep.subr.mxu0 0.0
      %544 = vmatpush1.msra.mxu0 0.0
      %545 = vmatprep.subr.mxu0 0.0
      %546 = vmatpush1.msra.mxu0 0.0
      %547 = vmatprep.subr.mxu0 0.0
      %548 = vmatpush1.msra.mxu0 0.0
      %549 = vmatprep.subr.mxu0 0.0
      %550 = vmatpush1.msra.mxu0 0.0
      %551 = vmatprep.subr.mxu0 0.0
      %552 = vmatpush1.msra.mxu0 0.0
      %553 = vmatprep.subr.mxu0 0.0
      %554 = vmatpush1.msra.mxu0 0.0
      %555 = vmatprep.subr.mxu0 0.0
      %556 = vmatpush1.msra.mxu0 0.0
      %557 = vmatprep.subr.mxu0 0.0
      %558 = vmatpush1.msra.mxu0 0.0
      %559 = vmatprep.subr.mxu0 0.0
      %560 = vmatpush1.msra.mxu0 0.0
      %561 = vmatprep.subr.mxu0 0.0
      %562 = vmatpush1.msra.mxu0 0.0
      %563 = vmatprep.subr.mxu0 0.0
      %564 = vmatpush1.msra.mxu0 0.0
      %565 = vmatprep.subr.mxu0 0.0
      %566 = vmatpush1.msra.mxu0 0.0
      %567 = vmatprep.subr.mxu0 0.0
      %568 = vmatpush1.msra.mxu0 0.0
      %569 = vmatprep.subr.mxu0 0.0
      %570 = vmatpush1.msra.mxu0 0.0
      %571 = vmatprep.subr.mxu0 0.0
      %572 = vmatpush1.msra.mxu0 0.0
      %573 = vmatprep.subr.mxu0 0.0
      %574 = vmatpush1.msra.mxu0 0.0
      %575 = vmatprep.subr.mxu0 0.0
      %576 = vmatpush1.msra.mxu0 0.0
      %577 = vmatprep.subr.mxu0 0.0
      %578 = vmatpush1.msra.mxu0 0.0
      %579 = vmatprep.subr.mxu0 0.0
      %580 = vmatpush1.msra.mxu0 0.0
      %581 = vmatprep.subr.mxu0 0.0
      %582 = vmatpush1.msra.mxu0 0.0
      %583 = vmatprep.subr.mxu0 0.0
      %584 = vmatpush1.msra.mxu0 0.0
      %585 = vmatprep.subr.mxu0 0.0
      %586 = vmatpush1.msra.mxu0 0.0
      %587 = vmatprep.subr.mxu0 0.0
      %588 = vmatpush1.msra.mxu0 0.0
      %589 = vmatprep.subr.mxu0 0.0
      %590 = vmatpush1.msra.mxu0 0.0
      %591 = vmatprep.mubr.f32.mxu0 0.0
      %592 = vmatmul.mubr.f32.gmra.mrb[0].mxu0 %v516
      %v593 = vpop.f32.mrb[0].mxu0
      %v594 = vadd.f32 0.0, %v593
      %v595 = vpop.f32.mrb[0].mxu0
      %596 = vmatprep.mubr.f32.mxu0 0.0
      %597 = vmatmul.mubr.f32.gmra.mrb[0].mxu0 %v519
      %v598 = vpop.f32.mrb[0].mxu0
      %v599 = vadd.f32 0.0, %v598
      %v600 = vpop.f32.mrb[0].mxu0
      %601 = vmatprep.mubr.f32.mxu0 0.0
      %602 = vmatmul.mubr.f32.gmra.mrb[0].mxu0 %v522
      %v603 = vpop.f32.mrb[0].mxu0
      %v604 = vadd.f32 0.0, %v603
      %v605 = vpop.f32.mrb[0].mxu0
      %606 = vmatprep.mubr.f32.mxu0 0.0
      %607 = vmatmul.mubr.f32.gmra.mrb[0].mxu0 %v525
      %v608 = vpop.f32.mrb[0].mxu0
      %v609 = vadd.f32 0.0, %v608
      %v610 = vpop.f32.mrb[0].mxu0
      %611 = vdwg.mxu0
      %613 = vrot.lane.b32.xlu0 %v599, 8
      %v614 = vpop.permute.xlu0 %613
      %617 = vrot.lane.b32.xlu0 %v604, 16
      %v618 = vpop.permute.xlu0 %617
      %621 = vrot.lane.b32.xlu0 %v609, 24
      %v622 = vpop.permute.xlu0 %621
      %v624 = vsel %vm349, %v594, %v614
      %vm625 = vcmask 130048
      %v626 = vsel %vm625, %v624, %v618
      %vm627 = vcmask 195584
      %v628 = vsel %vm627, %v626, %v622
      %v629 = vpack.c.bf16 %v628, %v628
      %v630 = vlaneseq
      %v631 = vshrl.u32 %v630, 7
      %v632 = vsub.s32 0, %v631
      %v633 = vrot.slane %v267, %v632
      %v638 = vunpack.c.l.b16 %v250
      %v639 = vunpack.c.l.b16 %v251
      %v640 = vunpack.c.l.b16 %v252
      %v641 = vunpack.c.l.b16 %v253
      %v642 = vpack.c.b16 %v639, %v638
      %v643 = vpack.c.b16 %v641, %v640
      %v647 = vsel %vm221, %v629, 0
      %649 = vmatprep.subr.bf16.mxu0 0
      %650 = vmatpush1.bf16.msra.mxu0 %v642
      %651 = vmatprep.subr.bf16.mxu0 0
      %652 = vmatpush1.bf16.msra.mxu0 %v643
      %653 = vmatprep.subr.bf16.mxu0 0
      %654 = vmatpush1.bf16.msra.mxu0 0
      %655 = vmatprep.subr.bf16.mxu0 0
      %656 = vmatpush1.bf16.msra.mxu0 0
      %657 = vmatprep.subr.bf16.mxu0 0
      %658 = vmatpush1.bf16.msra.mxu0 0
      %659 = vmatprep.subr.bf16.mxu0 0
      %660 = vmatpush1.bf16.msra.mxu0 0
      %661 = vmatprep.subr.bf16.mxu0 0
      %662 = vmatpush1.bf16.msra.mxu0 0
      %663 = vmatprep.subr.bf16.mxu0 0
      %664 = vmatpush1.bf16.msra.mxu0 0
      %665 = vmatprep.subr.bf16.mxu0 0
      %666 = vmatpush1.bf16.msra.mxu0 0
      %667 = vmatprep.subr.bf16.mxu0 0
      %668 = vmatpush1.bf16.msra.mxu0 0
      %669 = vmatprep.subr.bf16.mxu0 0
      %670 = vmatpush1.bf16.msra.mxu0 0
      %671 = vmatprep.subr.bf16.mxu0 0
      %672 = vmatpush1.bf16.msra.mxu0 0
      %673 = vmatprep.subr.bf16.mxu0 0
      %674 = vmatpush1.bf16.msra.mxu0 0
      %675 = vmatprep.subr.bf16.mxu0 0
      %676 = vmatpush1.bf16.msra.mxu0 0
      %677 = vmatprep.subr.bf16.mxu0 0
      %678 = vmatpush1.bf16.msra.mxu0 0
      %679 = vmatprep.subr.bf16.mxu0 0
      %680 = vmatpush1.bf16.msra.mxu0 0
      %681 = vmatprep.mubr.bf16.mxu0 0
      %682 = vmatmul.mubr.bf16.gmra.mrb[0].mxu0 %v647
      %v683 = vpop.f32.mrb[0].mxu0
      %v684 = vadd.f32 %v633, %v683
      %v685 = vpop.f32.mrb[0].mxu0
      %v686 = vpop.f32.mrb[0].mxu0
      %v687 = vpop.f32.mrb[0].mxu0
      %688 = vdwg.mxu0
      %v689 = vadd.f32 %v245, %v684
      %v690 = vsel %vm221, %v689, 0.0
      %691 = vadd.xlane.f32.xlu0 %v690
      %v692 = vpop.xlane.xlu0 %691
      %v693 = vmul.f32 %v692, %v225
      %v694 = vsub.f32 %v689, %v693
      %v695 = vmul.f32 %v694, %v694
      %v696 = vsel %vm221, %v695, 0.0
      %697 = vadd.xlane.f32.xlu0 %v696
      %v698 = vpop.xlane.xlu0 %697
      %v699 = vmul.f32 %v698, %v225
      %v700 = vadd.f32 %v699, 1e-12
      %v701 = vrsqrt.pop %v700
      %v702 = vmul.f32 %v694, %v701
      %v703 = vlaneseq
      %v704 = vshrl.u32 %v703, 7
      %v705 = vsub.s32 0, %v704
      %v706 = vrot.slane %v268, %v705
      %v707 = vmul.f32 %v702, %v706
      %v708 = vlaneseq
      %v709 = vshrl.u32 %v708, 7
      %v710 = vsub.s32 0, %v709
      %v711 = vrot.slane %v269, %v710
      %v712 = vadd.f32 %v707, %v711
      %v713 = vpack.c.bf16 %v712, %v712
      %v714 = vlaneseq
      %v715 = vshrl.u32 %v714, 7
      %v716 = vsub.s32 0, %v715
      %v717 = vrot.slane %v270, %v716
      %v722 = vunpack.c.l.b16 %v254
      %v723 = vunpack.c.l.b16 %v255
      %v724 = vunpack.c.l.b16 %v256
      %v725 = vunpack.c.l.b16 %v257
      %v726 = vpack.c.b16 %v723, %v722
      %v727 = vpack.c.b16 %v725, %v724
      %v731 = vsel %vm221, %v713, 0
      %733 = vmatprep.subr.bf16.mxu0 0
      %734 = vmatpush1.bf16.msra.mxu0 %v726
      %735 = vmatprep.subr.bf16.mxu0 0
      %736 = vmatpush1.bf16.msra.mxu0 %v727
      %737 = vmatprep.subr.bf16.mxu0 0
      %738 = vmatpush1.bf16.msra.mxu0 0
      %739 = vmatprep.subr.bf16.mxu0 0
      %740 = vmatpush1.bf16.msra.mxu0 0
      %741 = vmatprep.subr.bf16.mxu0 0
      %742 = vmatpush1.bf16.msra.mxu0 0
      %743 = vmatprep.subr.bf16.mxu0 0
      %744 = vmatpush1.bf16.msra.mxu0 0
      %745 = vmatprep.subr.bf16.mxu0 0
      %746 = vmatpush1.bf16.msra.mxu0 0
      %747 = vmatprep.subr.bf16.mxu0 0
      %748 = vmatpush1.bf16.msra.mxu0 0
      %749 = vmatprep.subr.bf16.mxu0 0
      %750 = vmatpush1.bf16.msra.mxu0 0
      %751 = vmatprep.subr.bf16.mxu0 0
      %752 = vmatpush1.bf16.msra.mxu0 0
      %753 = vmatprep.subr.bf16.mxu0 0
      %754 = vmatpush1.bf16.msra.mxu0 0
      %755 = vmatprep.subr.bf16.mxu0 0
      %756 = vmatpush1.bf16.msra.mxu0 0
      %757 = vmatprep.subr.bf16.mxu0 0
      %758 = vmatpush1.bf16.msra.mxu0 0
      %759 = vmatprep.subr.bf16.mxu0 0
      %760 = vmatpush1.bf16.msra.mxu0 0
      %761 = vmatprep.subr.bf16.mxu0 0
      %762 = vmatpush1.bf16.msra.mxu0 0
      %763 = vmatprep.subr.bf16.mxu0 0
      %764 = vmatpush1.bf16.msra.mxu0 0
      %765 = vmatprep.mubr.bf16.mxu0 0
      %766 = vmatmul.mubr.bf16.gmra.mrb[0].mxu0 %v731
      %v767 = vpop.f32.mrb[0].mxu0
      %v768 = vadd.f32 %v717, %v767
      %v769 = vpop.f32.mrb[0].mxu0
      %v770 = vpop.f32.mrb[0].mxu0
      %v771 = vpop.f32.mrb[0].mxu0
      %772 = vdwg.mxu0
      %v773 = vmul.f32 %v768, 0.5
      %v774 = vmul.f32 %v768, 0.70710677
      %vm775 = vcmp.ge.f32.partialorder %v774, 0.0
      %v776 = vsel %vm775, 1.0, -1.0
      %v777 = vand.u32 2147483647, %v774
      %v778 = vmul.f32 %v777, 0.3275911
      %v779 = vadd.f32 %v778, 1.0
      %v780 = vrcp.pop %v779
      %v781 = vmul.f32 1.0, %v780
      %v782 = vmul.f32 %v781, 1.0614054
      %v783 = vadd.f32 %v782, -1.4531521
      %v784 = vmul.f32 %v783, %v781
      %v785 = vadd.f32 %v784, 1.4214138
      %v786 = vmul.f32 %v785, %v781
      %v787 = vadd.f32 %v786, -0.28449672
      %v788 = vmul.f32 %v787, %v781
      %v789 = vadd.f32 %v788, 0.2548296
      %v790 = vmul.f32 %v789, %v781
      %v791 = vsub.f32 0.0, %v777
      %v792 = vmul.f32 %v791, %v777
      %v793 = vmul.f32 %v792, 1.442695
      %v794 = vpow.pop %v793
      %v795 = vmul.f32 %v790, %v794
      %v796 = vsub.f32 1.0, %v795
      %v797 = vmul.f32 %v776, %v796
      %v798 = vadd.f32 %v797, 1.0
      %v799 = vmul.f32 %v773, %v798
      %v800 = vpack.c.bf16 %v799, %v799
      %v801 = vlaneseq
      %v802 = vshrl.u32 %v801, 7
      %v803 = vsub.s32 0, %v802
      %v804 = vrot.slane %v271, %v803
      %v813 = vunpack.c.l.b16 %v258
      %v814 = vunpack.c.l.b16 %v259
      %v815 = vunpack.c.l.b16 %v260
      %v816 = vunpack.c.l.b16 %v261
      %v817 = vunpack.c.l.b16 %v262
      %v818 = vunpack.c.l.b16 %v263
      %v819 = vunpack.c.l.b16 %v264
      %v820 = vunpack.c.l.b16 %v265
      %v821 = vpack.c.b16 %v814, %v813
      %v822 = vpack.c.b16 %v816, %v815
      %v823 = vpack.c.b16 %v818, %v817
      %v824 = vpack.c.b16 %v820, %v819
      %vm829 = vcmask 523264
      %v831 = vsel %vm829, %v800, 0
      %833 = vmatprep.subr.bf16.mxu0 0
      %834 = vmatpush1.bf16.msra.mxu0 %v821
      %835 = vmatprep.subr.bf16.mxu0 0
      %836 = vmatpush1.bf16.msra.mxu0 %v822
      %837 = vmatprep.subr.bf16.mxu0 0
      %838 = vmatpush1.bf16.msra.mxu0 %v823
      %839 = vmatprep.subr.bf16.mxu0 0
      %840 = vmatpush1.bf16.msra.mxu0 %v824
      %841 = vmatprep.subr.bf16.mxu0 0
      %842 = vmatpush1.bf16.msra.mxu0 0
      %843 = vmatprep.subr.bf16.mxu0 0
      %844 = vmatpush1.bf16.msra.mxu0 0
      %845 = vmatprep.subr.bf16.mxu0 0
      %846 = vmatpush1.bf16.msra.mxu0 0
      %847 = vmatprep.subr.bf16.mxu0 0
      %848 = vmatpush1.bf16.msra.mxu0 0
      %849 = vmatprep.subr.bf16.mxu0 0
      %850 = vmatpush1.bf16.msra.mxu0 0
      %851 = vmatprep.subr.bf16.mxu0 0
      %852 = vmatpush1.bf16.msra.mxu0 0
      %853 = vmatprep.subr.bf16.mxu0 0
      %854 = vmatpush1.bf16.msra.mxu0 0
      %855 = vmatprep.subr.bf16.mxu0 0
      %856 = vmatpush1.bf16.msra.mxu0 0
      %857 = vmatprep.subr.bf16.mxu0 0
      %858 = vmatpush1.bf16.msra.mxu0 0
      %859 = vmatprep.subr.bf16.mxu0 0
      %860 = vmatpush1.bf16.msra.mxu0 0
      %861 = vmatprep.subr.bf16.mxu0 0
      %862 = vmatpush1.bf16.msra.mxu0 0
      %863 = vmatprep.subr.bf16.mxu0 0
      %864 = vmatpush1.bf16.msra.mxu0 0
      %865 = vmatprep.mubr.bf16.mxu0 0
      %866 = vmatmul.mubr.bf16.gmra.mrb[0].mxu0 %v831
      %v867 = vpop.f32.mrb[0].mxu0
      %v868 = vadd.f32 %v804, %v867
      %v869 = vpop.f32.mrb[0].mxu0
      %v870 = vpop.f32.mrb[0].mxu0
      %v871 = vpop.f32.mrb[0].mxu0
      %872 = vdwg.mxu0
      %v873 = vadd.f32 %v712, %v868
      %v874 = vsel %vm221, %v873, 0.0
      %875 = vadd.xlane.f32.xlu0 %v874
      %v876 = vpop.xlane.xlu0 %875
      %v877 = vmul.f32 %v876, %v225
      %v878 = vsub.f32 %v873, %v877
      %v879 = vmul.f32 %v878, %v878
      %v880 = vsel %vm221, %v879, 0.0
      %881 = vadd.xlane.f32.xlu0 %v880
      %v882 = vpop.xlane.xlu0 %881
      %v883 = vmul.f32 %v882, %v225
      %v884 = vadd.f32 %v883, 1e-12
      %v885 = vrsqrt.pop %v884
      %v886 = vmul.f32 %v878, %v885
      %v887 = vlaneseq
      %v888 = vshrl.u32 %v887, 7
      %v889 = vsub.s32 0, %v888
      %v890 = vrot.slane %v272, %v889
      %v891 = vmul.f32 %v886, %v890
      %v892 = vlaneseq
      %v893 = vshrl.u32 %v892, 7
      %v894 = vsub.s32 0, %v893
      %v895 = vrot.slane %v273, %v894
      %v896 = vadd.f32 %v891, %v895
      %v897 = vld [vmem:[%s2 + $0x50] sm:$0xf]
      %v898 = vld [vmem:[%s2 + $0x54] sm:$0xf]
      %v899 = vld [vmem:[%s2 + $0x58] sm:$0xf]
      %v900 = vld [vmem:[%s2 + $0x5c] sm:$0xf]
      %v901 = vld [vmem:[%s2 + $0x60] sm:$0xf]
      %v902 = vld [vmem:[%s2 + $0x64] sm:$0xf]
      %v903 = vld [vmem:[%s2 + $0x68] sm:$0xf]
      %v904 = vld [vmem:[%s2 + $0x6c] sm:$0xf]
      %v905 = vld [vmem:[%s2 + $0x70] sm:$0xf]
      %v906 = vld [vmem:[%s2 + $0x74] sm:$0xf]
      %v907 = vld [vmem:[%s2 + $0x78] sm:$0xf]
      %v908 = vld [vmem:[%s2 + $0x7c] sm:$0xf]
      %v909 = vld [vmem:[%s2 + $0x80] sm:$0xf]
      %v910 = vld [vmem:[%s2 + $0x84] sm:$0xf]
      %v911 = vld [vmem:[%s2 + $0x88] sm:$0xf]
      %v912 = vld [vmem:[%s2 + $0x8c] sm:$0xf]
      %v913 = vld [vmem:[%s2 + $0x90] sm:$0xf]
      %v914 = vld [vmem:[%s2 + $0x94] sm:$0xf]
      %v915 = vld [vmem:[%s2 + $0x98] sm:$0xf]
      %v916 = vld [vmem:[%s2 + $0x9c] sm:$0xf]
      %v917 = vld [vmem:[%s3 + $0xa] sm:$0x1]
      %v918 = vld [vmem:[%s3 + $0xb] sm:$0x1]
      %v919 = vld [vmem:[%s3 + $0xc] sm:$0x1]
      %v920 = vld [vmem:[%s3 + $0xd] sm:$0x1]
      %v921 = vld [vmem:[%s3 + $0xe] sm:$0x1]
      %v922 = vld [vmem:[%s3 + $0xf] sm:$0x1]
      %v923 = vld [vmem:[%s3 + $0x10] sm:$0x1]
      %v924 = vld [vmem:[%s3 + $0x11] sm:$0x1]
      %v925 = vpack.c.bf16 %v896, %v896
      %v926 = vlaneseq
      %v927 = vshrl.u32 %v926, 7
      %v928 = vsub.s32 0, %v927
      %v929 = vrot.slane %v917, %v928
      %v934 = vunpack.c.l.b16 %v897
      %v935 = vunpack.c.l.b16 %v898
      %v936 = vunpack.c.l.b16 %v899
      %v937 = vunpack.c.l.b16 %v900
      %v938 = vpack.c.b16 %v935, %v934
      %v939 = vpack.c.b16 %v937, %v936
      %v943 = vsel %vm221, %v925, 0
      %945 = vmatprep.subr.bf16.mxu0 0
      %946 = vmatpush1.bf16.msra.mxu0 %v938
      %947 = vmatprep.subr.bf16.mxu0 0
      %948 = vmatpush1.bf16.msra.mxu0 %v939
      %949 = vmatprep.subr.bf16.mxu0 0
      %950 = vmatpush1.bf16.msra.mxu0 0
      %951 = vmatprep.subr.bf16.mxu0 0
      %952 = vmatpush1.bf16.msra.mxu0 0
      %953 = vmatprep.subr.bf16.mxu0 0
      %954 = vmatpush1.bf16.msra.mxu0 0
      %955 = vmatprep.subr.bf16.mxu0 0
      %956 = vmatpush1.bf16.msra.mxu0 0
      %957 = vmatprep.subr.bf16.mxu0 0
      %958 = vmatpush1.bf16.msra.mxu0 0
      %959 = vmatprep.subr.bf16.mxu0 0
      %960 = vmatpush1.bf16.msra.mxu0 0
      %961 = vmatprep.subr.bf16.mxu0 0
      %962 = vmatpush1.bf16.msra.mxu0 0
      %963 = vmatprep.subr.bf16.mxu0 0
      %964 = vmatpush1.bf16.msra.mxu0 0
      %965 = vmatprep.subr.bf16.mxu0 0
      %966 = vmatpush1.bf16.msra.mxu0 0
      %967 = vmatprep.subr.bf16.mxu0 0
      %968 = vmatpush1.bf16.msra.mxu0 0
      %969 = vmatprep.subr.bf16.mxu0 0
      %970 = vmatpush1.bf16.msra.mxu0 0
      %971 = vmatprep.subr.bf16.mxu0 0
      %972 = vmatpush1.bf16.msra.mxu0 0
      %973 = vmatprep.subr.bf16.mxu0 0
      %974 = vmatpush1.bf16.msra.mxu0 0
      %975 = vmatprep.subr.bf16.mxu0 0
      %976 = vmatpush1.bf16.msra.mxu0 0
      %977 = vmatprep.mubr.bf16.mxu0 0
      %978 = vmatmul.mubr.bf16.gmra.mrb[0].mxu0 %v943
      %v979 = vpop.f32.mrb[0].mxu0
      %v980 = vadd.f32 %v929, %v979
      %v981 = vpop.f32.mrb[0].mxu0
      %v982 = vpop.f32.mrb[0].mxu0
      %v983 = vpop.f32.mrb[0].mxu0
      %984 = vdwg.mxu0
      %986 = vrot.lane.b32.xlu0 %v980, 120
      %v987 = vpop.permute.xlu0 %986
      %988 = vrot.lane.b32.xlu0 %v980, 112
      %v989 = vpop.permute.xlu0 %988
      %990 = vrot.lane.b32.xlu0 %v980, 104
      %v991 = vpop.permute.xlu0 %990
      %992 = vrot.lane.b32.xlu0 %v980, 96
      %v993 = vpop.permute.xlu0 %992
      %994 = vrot.lane.b32.xlu0 %v987, 96
      %v995 = vpop.permute.xlu0 %994
      %996 = vrot.lane.b32.xlu0 %v989, 96
      %v997 = vpop.permute.xlu0 %996
      %998 = vrot.lane.b32.xlu0 %v991, 96
      %v999 = vpop.permute.xlu0 %998
      %v1000 = vsel %vm349, %v980, 0
      %v1002 = vsel %vm349, %v987, 0
      %v1004 = vsel %vm349, %v989, 0
      %v1006 = vsel %vm349, %v991, 0
      %v1008 = vsel %vm349, %v993, 0
      %v1010 = vsel %vm349, %v995, 0
      %v1012 = vsel %vm349, %v997, 0
      %v1014 = vsel %vm349, %v999, 0
      %1016 = vmatprep.subr.mxu0 0.0
      %1017 = vmatpush1.xpose.msra.mxu0 %v1008
      %1018 = vmatprep.subr.mxu0 0.0
      %1019 = vmatpush1.xpose.msra.mxu0 %v1010
      %1020 = vmatprep.subr.mxu0 0.0
      %1021 = vmatpush1.xpose.msra.mxu0 %v1012
      %1022 = vmatprep.subr.mxu0 0.0
      %1023 = vmatpush1.xpose.msra.mxu0 %v1014
      %1024 = vmatprep.subr.mxu0 0.0
      %1025 = vmatpush1.xpose.msra.mxu0 0.0
      %1026 = vmatprep.subr.mxu0 0.0
      %1027 = vmatpush1.xpose.msra.mxu0 0.0
      %1028 = vmatprep.subr.mxu0 0.0
      %1029 = vmatpush1.xpose.msra.mxu0 0.0
      %1030 = vmatprep.subr.mxu0 0.0
      %1031 = vmatpush1.xpose.msra.mxu0 0.0
      %1032 = vmatprep.subr.mxu0 0.0
      %1033 = vmatpush1.xpose.msra.mxu0 0.0
      %1034 = vmatprep.subr.mxu0 0.0
      %1035 = vmatpush1.xpose.msra.mxu0 0.0
      %1036 = vmatprep.subr.mxu0 0.0
      %1037 = vmatpush1.xpose.msra.mxu0 0.0
      %1038 = vmatprep.subr.mxu0 0.0
      %1039 = vmatpush1.xpose.msra.mxu0 0.0
      %1040 = vmatprep.subr.mxu0 0.0
      %1041 = vmatpush1.xpose.msra.mxu0 0.0
      %1042 = vmatprep.subr.mxu0 0.0
      %1043 = vmatpush1.xpose.msra.mxu0 0.0
      %1044 = vmatprep.subr.mxu0 0.0
      %1045 = vmatpush1.xpose.msra.mxu0 0.0
      %1046 = vmatprep.subr.mxu0 0.0
      %1047 = vmatpush1.xpose.msra.mxu0 0.0
      %1048 = vmatprep.subr.mxu0 0.0
      %1049 = vmatpush1.xpose.msra.mxu0 0.0
      %1050 = vmatprep.subr.mxu0 0.0
      %1051 = vmatpush1.xpose.msra.mxu0 0.0
      %1052 = vmatprep.subr.mxu0 0.0
      %1053 = vmatpush1.xpose.msra.mxu0 0.0
      %1054 = vmatprep.subr.mxu0 0.0
      %1055 = vmatpush1.xpose.msra.mxu0 0.0
      %1056 = vmatprep.subr.mxu0 0.0
      %1057 = vmatpush1.xpose.msra.mxu0 0.0
      %1058 = vmatprep.subr.mxu0 0.0
      %1059 = vmatpush1.xpose.msra.mxu0 0.0
      %1060 = vmatprep.subr.mxu0 0.0
      %1061 = vmatpush1.xpose.msra.mxu0 0.0
      %1062 = vmatprep.subr.mxu0 0.0
      %1063 = vmatpush1.xpose.msra.mxu0 0.0
      %1064 = vmatprep.subr.mxu0 0.0
      %1065 = vmatpush1.xpose.msra.mxu0 0.0
      %1066 = vmatprep.subr.mxu0 0.0
      %1067 = vmatpush1.xpose.msra.mxu0 0.0
      %1068 = vmatprep.subr.mxu0 0.0
      %1069 = vmatpush1.xpose.msra.mxu0 0.0
      %1070 = vmatprep.subr.mxu0 0.0
      %1071 = vmatpush1.xpose.msra.mxu0 0.0
      %1072 = vmatprep.subr.mxu0 0.0
      %1073 = vmatpush1.xpose.msra.mxu0 0.0
      %1074 = vmatprep.subr.mxu0 0.0
      %1075 = vmatpush1.xpose.msra.mxu0 0.0
      %1076 = vmatprep.subr.mxu0 0.0
      %1077 = vmatpush1.xpose.msra.mxu0 0.0
      %1078 = vmatprep.subr.mxu0 0.0
      %1079 = vmatpush1.xpose.msra.mxu0 0.0
      %1080 = vmatprep.mubr.f32.mxu0 0.0
      %1081 = vmatmul.mubr.f32.gmra.mrb[0].mxu0 %v1000
      %v1082 = vpop.f32.mrb[0].mxu0
      %v1083 = vadd.f32 0.0, %v1082
      %v1084 = vpop.f32.mrb[0].mxu0
      %1085 = vmatprep.mubr.f32.mxu0 0.0
      %1086 = vmatmul.mubr.f32.gmra.mrb[0].mxu0 %v1002
      %v1087 = vpop.f32.mrb[0].mxu0
      %v1088 = vadd.f32 0.0, %v1087
      %v1089 = vpop.f32.mrb[0].mxu0
      %1090 = vmatprep.mubr.f32.mxu0 0.0
      %1091 = vmatmul.mubr.f32.gmra.mrb[0].mxu0 %v1004
      %v1092 = vpop.f32.mrb[0].mxu0
      %v1093 = vadd.f32 0.0, %v1092
      %v1094 = vpop.f32.mrb[0].mxu0
      %1095 = vmatprep.mubr.f32.mxu0 0.0
      %1096 = vmatmul.mubr.f32.gmra.mrb[0].mxu0 %v1006
      %v1097 = vpop.f32.mrb[0].mxu0
      %v1098 = vadd.f32 0.0, %v1097
      %v1099 = vpop.f32.mrb[0].mxu0
      %1100 = vdwg.mxu0
      %v1101 = vmul.f32 %v1083, 0.35355338
      %v1102 = vmul.f32 %v1088, 0.35355338
      %v1103 = vmul.f32 %v1093, 0.35355338
      %v1104 = vmul.f32 %v1098, 0.35355338
      %v1105 = vadd.f32 %v1101, %v215
      %v1106 = vadd.f32 %v1102, %v216
      %v1107 = vadd.f32 %v1103, %v217
      %v1108 = vadd.f32 %v1104, %v218
      %v1109 = vsel %vm221, %v1105, -inf
      %1110 = vmax.xlane.f32.xlu0 %v1109
      %v1111 = vpop.xlane.xlu0 %1110
      %v1112 = vsel %vm221, %v1106, -inf
      %1113 = vmax.xlane.f32.xlu0 %v1112
      %v1114 = vpop.xlane.xlu0 %1113
      %v1115 = vsel %vm221, %v1107, -inf
      %1116 = vmax.xlane.f32.xlu0 %v1115
      %v1117 = vpop.xlane.xlu0 %1116
      %v1118 = vsel %vm221, %v1108, -inf
      %1119 = vmax.xlane.f32.xlu0 %v1118
      %v1120 = vpop.xlane.xlu0 %1119
      %v1121 = vsub.f32 %v1105, %v1111
      %v1122 = vsub.f32 %v1106, %v1114
      %v1123 = vsub.f32 %v1107, %v1117
      %v1124 = vsub.f32 %v1108, %v1120
      %v1125 = vmul.f32 %v1121, 1.442695
      %v1126 = vpow.pop %v1125
      %v1127 = vmul.f32 %v1122, 1.442695
      %v1128 = vpow.pop %v1127
      %v1129 = vmul.f32 %v1123, 1.442695
      %v1130 = vpow.pop %v1129
      %v1131 = vmul.f32 %v1124, 1.442695
      %v1132 = vpow.pop %v1131
      %v1133 = vsel %vm221, %v1126, 0.0
      %1134 = vadd.xlane.f32.xlu0 %v1133
      %v1135 = vpop.xlane.xlu0 %1134
      %v1136 = vsel %vm221, %v1128, 0.0
      %1137 = vadd.xlane.f32.xlu0 %v1136
      %v1138 = vpop.xlane.xlu0 %1137
      %v1139 = vsel %vm221, %v1130, 0.0
      %1140 = vadd.xlane.f32.xlu0 %v1139
      %v1141 = vpop.xlane.xlu0 %1140
      %v1142 = vsel %vm221, %v1132, 0.0
      %1143 = vadd.xlane.f32.xlu0 %v1142
      %v1144 = vpop.xlane.xlu0 %1143
      %v1145 = vrcp.pop %v1135
      %v1146 = vrcp.pop %v1138
      %v1147 = vrcp.pop %v1141
      %v1148 = vrcp.pop %v1144
      %v1149 = vmul.f32 %v1126, %v1145
      %v1150 = vmul.f32 %v1128, %v1146
      %v1151 = vmul.f32 %v1130, %v1147
      %v1152 = vmul.f32 %v1132, %v1148
      %1153 = vrot.lane.b32.xlu0 %v980, 64
      %v1154 = vpop.permute.xlu0 %1153
      %1155 = vrot.lane.b32.xlu0 %v987, 64
      %v1156 = vpop.permute.xlu0 %1155
      %1157 = vrot.lane.b32.xlu0 %v989, 64
      %v1158 = vpop.permute.xlu0 %1157
      %1159 = vrot.lane.b32.xlu0 %v991, 64
      %v1160 = vpop.permute.xlu0 %1159
      %v1166 = vsel %vm221, %v1149, 0
      %v1169 = vsel %vm221, %v1150, 0
      %v1172 = vsel %vm221, %v1151, 0
      %v1175 = vsel %vm221, %v1152, 0
      %1177 = vmatprep.subr.mxu0 0.0
      %1178 = vmatpush1.msra.mxu0 %v1154
      %1179 = vmatprep.subr.mxu0 0.0
      %1180 = vmatpush1.msra.mxu0 %v1156
      %1181 = vmatprep.subr.mxu0 0.0
      %1182 = vmatpush1.msra.mxu0 %v1158
      %1183 = vmatprep.subr.mxu0 0.0
      %1184 = vmatpush1.msra.mxu0 %v1160
      %1185 = vmatprep.subr.mxu0 0.0
      %1186 = vmatpush1.msra.mxu0 0.0
      %1187 = vmatprep.subr.mxu0 0.0
      %1188 = vmatpush1.msra.mxu0 0.0
      %1189 = vmatprep.subr.mxu0 0.0
      %1190 = vmatpush1.msra.mxu0 0.0
      %1191 = vmatprep.subr.mxu0 0.0
      %1192 = vmatpush1.msra.mxu0 0.0
      %1193 = vmatprep.subr.mxu0 0.0
      %1194 = vmatpush1.msra.mxu0 0.0
      %1195 = vmatprep.subr.mxu0 0.0
      %1196 = vmatpush1.msra.mxu0 0.0
      %1197 = vmatprep.subr.mxu0 0.0
      %1198 = vmatpush1.msra.mxu0 0.0
      %1199 = vmatprep.subr.mxu0 0.0
      %1200 = vmatpush1.msra.mxu0 0.0
      %1201 = vmatprep.subr.mxu0 0.0
      %1202 = vmatpush1.msra.mxu0 0.0
      %1203 = vmatprep.subr.mxu0 0.0
      %1204 = vmatpush1.msra.mxu0 0.0
      %1205 = vmatprep.subr.mxu0 0.0
      %1206 = vmatpush1.msra.mxu0 0.0
      %1207 = vmatprep.subr.mxu0 0.0
      %1208 = vmatpush1.msra.mxu0 0.0
      %1209 = vmatprep.subr.mxu0 0.0
      %1210 = vmatpush1.msra.mxu0 0.0
      %1211 = vmatprep.subr.mxu0 0.0
      %1212 = vmatpush1.msra.mxu0 0.0
      %1213 = vmatprep.subr.mxu0 0.0
      %1214 = vmatpush1.msra.mxu0 0.0
      %1215 = vmatprep.subr.mxu0 0.0
      %1216 = vmatpush1.msra.mxu0 0.0
      %1217 = vmatprep.subr.mxu0 0.0
      %1218 = vmatpush1.msra.mxu0 0.0
      %1219 = vmatprep.subr.mxu0 0.0
      %1220 = vmatpush1.msra.mxu0 0.0
      %1221 = vmatprep.subr.mxu0 0.0
      %1222 = vmatpush1.msra.mxu0 0.0
      %1223 = vmatprep.subr.mxu0 0.0
      %1224 = vmatpush1.msra.mxu0 0.0
      %1225 = vmatprep.subr.mxu0 0.0
      %1226 = vmatpush1.msra.mxu0 0.0
      %1227 = vmatprep.subr.mxu0 0.0
      %1228 = vmatpush1.msra.mxu0 0.0
      %1229 = vmatprep.subr.mxu0 0.0
      %1230 = vmatpush1.msra.mxu0 0.0
      %1231 = vmatprep.subr.mxu0 0.0
      %1232 = vmatpush1.msra.mxu0 0.0
      %1233 = vmatprep.subr.mxu0 0.0
      %1234 = vmatpush1.msra.mxu0 0.0
      %1235 = vmatprep.subr.mxu0 0.0
      %1236 = vmatpush1.msra.mxu0 0.0
      %1237 = vmatprep.subr.mxu0 0.0
      %1238 = vmatpush1.msra.mxu0 0.0
      %1239 = vmatprep.subr.mxu0 0.0
      %1240 = vmatpush1.msra.mxu0 0.0
      %1241 = vmatprep.mubr.f32.mxu0 0.0
      %1242 = vmatmul.mubr.f32.gmra.mrb[0].mxu0 %v1166
      %v1243 = vpop.f32.mrb[0].mxu0
      %v1244 = vadd.f32 0.0, %v1243
      %v1245 = vpop.f32.mrb[0].mxu0
      %1246 = vmatprep.mubr.f32.mxu0 0.0
      %1247 = vmatmul.mubr.f32.gmra.mrb[0].mxu0 %v1169
      %v1248 = vpop.f32.mrb[0].mxu0
      %v1249 = vadd.f32 0.0, %v1248
      %v1250 = vpop.f32.mrb[0].mxu0
      %1251 = vmatprep.mubr.f32.mxu0 0.0
      %1252 = vmatmul.mubr.f32.gmra.mrb[0].mxu0 %v1172
      %v1253 = vpop.f32.mrb[0].mxu0
      %v1254 = vadd.f32 0.0, %v1253
      %v1255 = vpop.f32.mrb[0].mxu0
      %1256 = vmatprep.mubr.f32.mxu0 0.0
      %1257 = vmatmul.mubr.f32.gmra.mrb[0].mxu0 %v1175
      %v1258 = vpop.f32.mrb[0].mxu0
      %v1259 = vadd.f32 0.0, %v1258
      %v1260 = vpop.f32.mrb[0].mxu0
      %1261 = vdwg.mxu0
      %1263 = vrot.lane.b32.xlu0 %v1249, 8
      %v1264 = vpop.permute.xlu0 %1263
      %1267 = vrot.lane.b32.xlu0 %v1254, 16
      %v1268 = vpop.permute.xlu0 %1267
      %1271 = vrot.lane.b32.xlu0 %v1259, 24
      %v1272 = vpop.permute.xlu0 %1271
      %v1274 = vsel %vm349, %v1244, %v1264
      %v1275 = vsel %vm625, %v1274, %v1268
      %v1276 = vsel %vm627, %v1275, %v1272
      %v1277 = vpack.c.bf16 %v1276, %v1276
      %v1278 = vlaneseq
      %v1279 = vshrl.u32 %v1278, 7
      %v1280 = vsub.s32 0, %v1279
      %v1281 = vrot.slane %v918, %v1280
      %v1286 = vunpack.c.l.b16 %v901
      %v1287 = vunpack.c.l.b16 %v902
      %v1288 = vunpack.c.l.b16 %v903
      %v1289 = vunpack.c.l.b16 %v904
      %v1290 = vpack.c.b16 %v1287, %v1286
      %v1291 = vpack.c.b16 %v1289, %v1288
      %v1295 = vsel %vm221, %v1277, 0
      %1297 = vmatprep.subr.bf16.mxu0 0
      %1298 = vmatpush1.bf16.msra.mxu0 %v1290
      %1299 = vmatprep.subr.bf16.mxu0 0
      %1300 = vmatpush1.bf16.msra.mxu0 %v1291
      %1301 = vmatprep.subr.bf16.mxu0 0
      %1302 = vmatpush1.bf16.msra.mxu0 0
      %1303 = vmatprep.subr.bf16.mxu0 0
      %1304 = vmatpush1.bf16.msra.mxu0 0
      %1305 = vmatprep.subr.bf16.mxu0 0
      %1306 = vmatpush1.bf16.msra.mxu0 0
      %1307 = vmatprep.subr.bf16.mxu0 0
      %1308 = vmatpush1.bf16.msra.mxu0 0
      %1309 = vmatprep.subr.bf16.mxu0 0
      %1310 = vmatpush1.bf16.msra.mxu0 0
      %1311 = vmatprep.subr.bf16.mxu0 0
      %1312 = vmatpush1.bf16.msra.mxu0 0
      %1313 = vmatprep.subr.bf16.mxu0 0
      %1314 = vmatpush1.bf16.msra.mxu0 0
      %1315 = vmatprep.subr.bf16.mxu0 0
      %1316 = vmatpush1.bf16.msra.mxu0 0
      %1317 = vmatprep.subr.bf16.mxu0 0
      %1318 = vmatpush1.bf16.msra.mxu0 0
      %1319 = vmatprep.subr.bf16.mxu0 0
      %1320 = vmatpush1.bf16.msra.mxu0 0
      %1321 = vmatprep.subr.bf16.mxu0 0
      %1322 = vmatpush1.bf16.msra.mxu0 0
      %1323 = vmatprep.subr.bf16.mxu0 0
      %1324 = vmatpush1.bf16.msra.mxu0 0
      %1325 = vmatprep.subr.bf16.mxu0 0
      %1326 = vmatpush1.bf16.msra.mxu0 0
      %1327 = vmatprep.subr.bf16.mxu0 0
      %1328 = vmatpush1.bf16.msra.mxu0 0
      %1329 = vmatprep.mubr.bf16.mxu0 0
      %1330 = vmatmul.mubr.bf16.gmra.mrb[0].mxu0 %v1295
      %v1331 = vpop.f32.mrb[0].mxu0
      %v1332 = vadd.f32 %v1281, %v1331
      %v1333 = vpop.f32.mrb[0].mxu0
      %v1334 = vpop.f32.mrb[0].mxu0
      %v1335 = vpop.f32.mrb[0].mxu0
      %1336 = vdwg.mxu0
      %v1337 = vadd.f32 %v896, %v1332
      %v1338 = vsel %vm221, %v1337, 0.0
      %1339 = vadd.xlane.f32.xlu0 %v1338
      %v1340 = vpop.xlane.xlu0 %1339
      %v1341 = vmul.f32 %v1340, %v225
      %v1342 = vsub.f32 %v1337, %v1341
      %v1343 = vmul.f32 %v1342, %v1342
      %v1344 = vsel %vm221, %v1343, 0.0
      %1345 = vadd.xlane.f32.xlu0 %v1344
      %v1346 = vpop.xlane.xlu0 %1345
      %v1347 = vmul.f32 %v1346, %v225
      %v1348 = vadd.f32 %v1347, 1e-12
      %v1349 = vrsqrt.pop %v1348
      %v1350 = vmul.f32 %v1342, %v1349
      %v1351 = vlaneseq
      %v1352 = vshrl.u32 %v1351, 7
      %v1353 = vsub.s32 0, %v1352
      %v1354 = vrot.slane %v919, %v1353
      %v1355 = vmul.f32 %v1350, %v1354
      %v1356 = vlaneseq
      %v1357 = vshrl.u32 %v1356, 7
      %v1358 = vsub.s32 0, %v1357
      %v1359 = vrot.slane %v920, %v1358
      %v1360 = vadd.f32 %v1355, %v1359
      %v1361 = vpack.c.bf16 %v1360, %v1360
      %v1362 = vlaneseq
      %v1363 = vshrl.u32 %v1362, 7
      %v1364 = vsub.s32 0, %v1363
      %v1365 = vrot.slane %v921, %v1364
      %v1370 = vunpack.c.l.b16 %v905
      %v1371 = vunpack.c.l.b16 %v906
      %v1372 = vunpack.c.l.b16 %v907
      %v1373 = vunpack.c.l.b16 %v908
      %v1374 = vpack.c.b16 %v1371, %v1370
      %v1375 = vpack.c.b16 %v1373, %v1372
      %v1379 = vsel %vm221, %v1361, 0
      %1381 = vmatprep.subr.bf16.mxu0 0
      %1382 = vmatpush1.bf16.msra.mxu0 %v1374
      %1383 = vmatprep.subr.bf16.mxu0 0
      %1384 = vmatpush1.bf16.msra.mxu0 %v1375
      %1385 = vmatprep.subr.bf16.mxu0 0
      %1386 = vmatpush1.bf16.msra.mxu0 0
      %1387 = vmatprep.subr.bf16.mxu0 0
      %1388 = vmatpush1.bf16.msra.mxu0 0
      %1389 = vmatprep.subr.bf16.mxu0 0
      %1390 = vmatpush1.bf16.msra.mxu0 0
      %1391 = vmatprep.subr.bf16.mxu0 0
      %1392 = vmatpush1.bf16.msra.mxu0 0
      %1393 = vmatprep.subr.bf16.mxu0 0
      %1394 = vmatpush1.bf16.msra.mxu0 0
      %1395 = vmatprep.subr.bf16.mxu0 0
      %1396 = vmatpush1.bf16.msra.mxu0 0
      %1397 = vmatprep.subr.bf16.mxu0 0
      %1398 = vmatpush1.bf16.msra.mxu0 0
      %1399 = vmatprep.subr.bf16.mxu0 0
      %1400 = vmatpush1.bf16.msra.mxu0 0
      %1401 = vmatprep.subr.bf16.mxu0 0
      %1402 = vmatpush1.bf16.msra.mxu0 0
      %1403 = vmatprep.subr.bf16.mxu0 0
      %1404 = vmatpush1.bf16.msra.mxu0 0
      %1405 = vmatprep.subr.bf16.mxu0 0
      %1406 = vmatpush1.bf16.msra.mxu0 0
      %1407 = vmatprep.subr.bf16.mxu0 0
      %1408 = vmatpush1.bf16.msra.mxu0 0
      %1409 = vmatprep.subr.bf16.mxu0 0
      %1410 = vmatpush1.bf16.msra.mxu0 0
      %1411 = vmatprep.subr.bf16.mxu0 0
      %1412 = vmatpush1.bf16.msra.mxu0 0
      %1413 = vmatprep.mubr.bf16.mxu0 0
      %1414 = vmatmul.mubr.bf16.gmra.mrb[0].mxu0 %v1379
      %v1415 = vpop.f32.mrb[0].mxu0
      %v1416 = vadd.f32 %v1365, %v1415
      %v1417 = vpop.f32.mrb[0].mxu0
      %v1418 = vpop.f32.mrb[0].mxu0
      %v1419 = vpop.f32.mrb[0].mxu0
      %1420 = vdwg.mxu0
      %v1421 = vmul.f32 %v1416, 0.5
      %v1422 = vmul.f32 %v1416, 0.70710677
      %vm1423 = vcmp.ge.f32.partialorder %v1422, 0.0
      %v1424 = vsel %vm1423, 1.0, -1.0
      %v1425 = vand.u32 2147483647, %v1422
      %v1426 = vmul.f32 %v1425, 0.3275911
      %v1427 = vadd.f32 %v1426, 1.0
      %v1428 = vrcp.pop %v1427
      %v1429 = vmul.f32 1.0, %v1428
      %v1430 = vmul.f32 %v1429, 1.0614054
      %v1431 = vadd.f32 %v1430, -1.4531521
      %v1432 = vmul.f32 %v1431, %v1429
      %v1433 = vadd.f32 %v1432, 1.4214138
      %v1434 = vmul.f32 %v1433, %v1429
      %v1435 = vadd.f32 %v1434, -0.28449672
      %v1436 = vmul.f32 %v1435, %v1429
      %v1437 = vadd.f32 %v1436, 0.2548296
      %v1438 = vmul.f32 %v1437, %v1429
      %v1439 = vsub.f32 0.0, %v1425
      %v1440 = vmul.f32 %v1439, %v1425
      %v1441 = vmul.f32 %v1440, 1.442695
      %v1442 = vpow.pop %v1441
      %v1443 = vmul.f32 %v1438, %v1442
      %v1444 = vsub.f32 1.0, %v1443
      %v1445 = vmul.f32 %v1424, %v1444
      %v1446 = vadd.f32 %v1445, 1.0
      %v1447 = vmul.f32 %v1421, %v1446
      %v1448 = vpack.c.bf16 %v1447, %v1447
      %v1449 = vlaneseq
      %v1450 = vshrl.u32 %v1449, 7
      %v1451 = vsub.s32 0, %v1450
      %v1452 = vrot.slane %v922, %v1451
      %v1461 = vunpack.c.l.b16 %v909
      %v1462 = vunpack.c.l.b16 %v910
      %v1463 = vunpack.c.l.b16 %v911
      %v1464 = vunpack.c.l.b16 %v912
      %v1465 = vunpack.c.l.b16 %v913
      %v1466 = vunpack.c.l.b16 %v914
      %v1467 = vunpack.c.l.b16 %v915
      %v1468 = vunpack.c.l.b16 %v916
      %v1469 = vpack.c.b16 %v1462, %v1461
      %v1470 = vpack.c.b16 %v1464, %v1463
      %v1471 = vpack.c.b16 %v1466, %v1465
      %v1472 = vpack.c.b16 %v1468, %v1467
      %v1478 = vsel %vm829, %v1448, 0
      %1480 = vmatprep.subr.bf16.mxu0 0
      %1481 = vmatpush1.bf16.msra.mxu0 %v1469
      %1482 = vmatprep.subr.bf16.mxu0 0
      %1483 = vmatpush1.bf16.msra.mxu0 %v1470
      %1484 = vmatprep.subr.bf16.mxu0 0
      %1485 = vmatpush1.bf16.msra.mxu0 %v1471
      %1486 = vmatprep.subr.bf16.mxu0 0
      %1487 = vmatpush1.bf16.msra.mxu0 %v1472
      %1488 = vmatprep.subr.bf16.mxu0 0
      %1489 = vmatpush1.bf16.msra.mxu0 0
      %1490 = vmatprep.subr.bf16.mxu0 0
      %1491 = vmatpush1.bf16.msra.mxu0 0
      %1492 = vmatprep.subr.bf16.mxu0 0
      %1493 = vmatpush1.bf16.msra.mxu0 0
      %1494 = vmatprep.subr.bf16.mxu0 0
      %1495 = vmatpush1.bf16.msra.mxu0 0
      %1496 = vmatprep.subr.bf16.mxu0 0
      %1497 = vmatpush1.bf16.msra.mxu0 0
      %1498 = vmatprep.subr.bf16.mxu0 0
      %1499 = vmatpush1.bf16.msra.mxu0 0
      %1500 = vmatprep.subr.bf16.mxu0 0
      %1501 = vmatpush1.bf16.msra.mxu0 0
      %1502 = vmatprep.subr.bf16.mxu0 0
      %1503 = vmatpush1.bf16.msra.mxu0 0
      %1504 = vmatprep.subr.bf16.mxu0 0
      %1505 = vmatpush1.bf16.msra.mxu0 0
      %1506 = vmatprep.subr.bf16.mxu0 0
      %1507 = vmatpush1.bf16.msra.mxu0 0
      %1508 = vmatprep.subr.bf16.mxu0 0
      %1509 = vmatpush1.bf16.msra.mxu0 0
      %1510 = vmatprep.subr.bf16.mxu0 0
      %1511 = vmatpush1.bf16.msra.mxu0 0
      %1512 = vmatprep.mubr.bf16.mxu0 0
      %1513 = vmatmul.mubr.bf16.gmra.mrb[0].mxu0 %v1478
      %v1514 = vpop.f32.mrb[0].mxu0
      %v1515 = vadd.f32 %v1452, %v1514
      %v1516 = vpop.f32.mrb[0].mxu0
      %v1517 = vpop.f32.mrb[0].mxu0
      %v1518 = vpop.f32.mrb[0].mxu0
      %1519 = vdwg.mxu0
      %v1520 = vadd.f32 %v1360, %v1515
      %v1521 = vsel %vm221, %v1520, 0.0
      %1522 = vadd.xlane.f32.xlu0 %v1521
      %v1523 = vpop.xlane.xlu0 %1522
      %v1524 = vmul.f32 %v1523, %v225
      %v1525 = vsub.f32 %v1520, %v1524
      %v1526 = vmul.f32 %v1525, %v1525
      %v1527 = vsel %vm221, %v1526, 0.0
      %1528 = vadd.xlane.f32.xlu0 %v1527
      %v1529 = vpop.xlane.xlu0 %1528
      %v1530 = vmul.f32 %v1529, %v225
      %v1531 = vadd.f32 %v1530, 1e-12
      %v1532 = vrsqrt.pop %v1531
      %v1533 = vmul.f32 %v1525, %v1532
      %v1534 = vlaneseq
      %v1535 = vshrl.u32 %v1534, 7
      %v1536 = vsub.s32 0, %v1535
      %v1537 = vrot.slane %v923, %v1536
      %v1538 = vmul.f32 %v1533, %v1537
      %v1539 = vlaneseq
      %v1540 = vshrl.u32 %v1539, 7
      %v1541 = vsub.s32 0, %v1540
      %v1542 = vrot.slane %v924, %v1541
      %v1543 = vadd.f32 %v1538, %v1542
      %v1544 = vsel %vm221, %v1543, 0.0
      %v1545 = vrot.slane %v1544, 4
      %v1546 = vadd.f32 %v1544, %v1545
      %v1547 = vrot.slane %v1546, 2
      %v1548 = vadd.f32 %v1546, %v1547
      %v1549 = vrot.slane %v1548, 1
      %v1550 = vadd.f32 %v1548, %v1549
      %v1551 = vrcp.pop 8.0
      %v1552 = vmul.f32 %v1550, %v1551
      %v1553 = vld [vmem:[%s3 + $0x12] sm:$0x1]
      %v1554 = vld [vmem:[%s3 + $0x13] sm:$0x1]
      %v1555 = vmul.f32 %v1552, %v1553
      %vm1556 = vcmask 253952
      %v1557 = vsel %vm1556, %v1555, 0.0
      %1558 = vadd.xlane.f32.xlu0 %v1557
      %v1559 = vpop.xlane.xlu0 %1558
      %v1560 = vadd.f32 %v1559, %v1554
      %v1561 = vmul.f32 %v1560, 1.442695
      %v1562 = vpow.pop %v1561
      %s1564 = vtos %v1562
      %v1565 = vstv %s1564
      %1567 = vst [vmem:[%s212] sm:$0xff] %v1565
      %p1568 = scmp.lt.s32.totalorder %s15, 1
      %s1569 = scalar_select %p1568, %s15, 1
      %s1570 = smul.addr %s1569, 8
      %s1571 = scalar_lea.vmem %s4, %s1570
      // Predicated region
      $region37: #{bert_length_forward.1} parent=35 // pred_check
        %p1572 = pneg %p127
      $region38: #{bert_length_forward.1} parent=35 // pred_check_branch
        %1574 = sbr.rel (%p1572) target = $region40
      $region39: #{bert_length_forward.1} parent=35 // pred_region
        _
      $region40: #{bert_length_forward.1} parent=35 // pred_fallthru
        _
    $region36: #{bert_length_forward.1} parent=5 // pred_fallthru
      _
    %p1575 = scmp.le.s32.totalorder 2, %s10
    // Predicated region
    $region41: #{bert_length_forward.1} parent=5 // pred_check
      %p1576 = pneg %p1575
    $region42: #{bert_length_forward.1} parent=5 // pred_check_branch
      %1578 = sbr.rel (%p1576) target = $region44
    $region43: #{bert_length_forward.1} parent=5 // pred_region
      %s1579 = ssub.s32 %s10, 2
      // Predicated region
      $region45: #{bert_length_forward.1} parent=43 // pred_check
        %p1580 = pneg %p133
      $region46: #{bert_length_forward.1} parent=43 // pred_check_branch
        %1582 = sbr.rel (%p1580) target = $region48
      $region47: #{bert_length_forward.1} parent=43 // pred_region
        %p1583 = scmp.lt.s32.totalorder %s16, 1
        %s1584 = scalar_select %p1583, %s16, 1
        %s1585 = smul.addr %s1584, 8
        %s1586 = scalar_lea.vmem %s4, %s1585
      $region48: #{bert_length_forward.1} parent=43 // pred_fallthru
        _
    $region44: #{bert_length_forward.1} parent=5 // pred_fallthru
      _
  $region6: #{bert_length_forward.1} parent=0 // loop_footer
    %s14 = sadd.s32 1, %s10
  $region7: #{bert_length_forward.1} parent=0 // loop_footer_branch
    %9 = sbr.rel target = $region3
  $region8: #{bert_length_forward.1} parent=0 // loop_exit
    _

</llo_original>
